<compile_context>
chip_gen: v5e
topology: v5e:2x2
jax: 0.10.0
libtpu: 0.0.40
codegen_flags: <defaults>
</compile_context>

<pallas_src>
import numpy as np
import jax
import jax.numpy as jnp
from jax import lax
from jax.experimental import pallas as pl
from jax.experimental.pallas import tpu as pltpu


def make_rnn_md_kernel(T, alpha, md_alpha, inv_tau_post, inv_md_size, unroll):
    one_minus_alpha = 1.0 - alpha
    f32 = jnp.float32

    def wta(v):
        # winner_take_all (num_active == 1): threshold = median(top-2) = (top1+top2)/2.
        # Every max entry passes (thr <= top1); every non-max entry is <= top2 < thr
        # (and with ties at the max, thr == top1 so they all still pass).  Hence it is
        # exactly (v >= max(v)): one XLU max + one VPU compare instead of three reductions.
        return jnp.where(v >= jnp.max(v), 1.0, 0.0).astype(f32)

    def kernel(x_ref, w_in_ref, b_comb_ref, w_hh_ref, w_fc_ref, b_fc_ref,
               delta_pre_ref, wpfc2md0_ref, wmd2pfc0_ref,
               out_ref, act_ref):
        # Loop-invariant loads (hoisted off the serial critical path).
        w_hh = w_hh_ref[...]                 # (H, H)  h2h weight^T
        delta_pre = delta_pre_ref[...]       # (H, M)  0.5*Hebb_lr*(mask-0.5), pre-broadcast

        # Input projection for every timestep in one MXU matmul, written straight into the
        # (T, H) activity output.  Row t is read exactly once (as ext) before being
        # overwritten with h_new, so act_ref doubles as the ext-input buffer: no scratch.
        # ext[t] = x[t] @ (W_in^T * mask) + (b_in*mask + b_hh)
        act_ref[...] = jnp.dot(x_ref[...], w_in_ref[...],
                               preferred_element_type=f32) + b_comb_ref[...]

        H = w_hh.shape[0]
        M = wpfc2md0_ref.shape[1]

        # TODO(synk): weight-stationary MXU (matmul_push_rhs/acc_lhs/pop) for w_hh skipped;
        # at H=32 the tile is far below MXU dimensions and jnp.dot lowers cleanly.

        def body(t, carry):
            hidden, mdinp, mdpost, wpfc2md, wmd2pfc = carry

            ext = act_ref[pl.ds(t, 1), :]                                 # (1, H)
            rec = jnp.dot(hidden, w_hh, preferred_element_type=f32)       # (1, H)
            pre = ext + rec

            # ---- MD_GYM step (driven by the *previous* hidden state) ----
            mdinp = mdinp + md_alpha * (
                -mdinp + jnp.dot(hidden, wpfc2md, preferred_element_type=f32))
            md_out = wta(mdinp)                                           # (1, M)

            # Hebbian traces + plasticity (update_weights / update_trace).
            mdpost = mdpost + inv_tau_post * (-mdpost + md_out)
            md_out_trace = wta(mdpost)                                    # (1, M)

            # Rank-1 Hebbian delta in (H, M) orientation — no transpose needed.
            delta_t = delta_pre * (md_out_trace - 0.5)                    # (H, M)
            wpfc2md = jnp.clip(wpfc2md + delta_t, 0.0, 1.0)               # wPFC2MD^T
            wmd2pfc = jnp.clip(wmd2pfc + delta_t, -1.0, 0.0)              # wMD2PFC (native)

            # Additive MD -> PFC current with the freshly updated wMD2PFC (as in reference).
            md2pfc = lax.dot_general(
                md_out, wmd2pfc,
                dimension_numbers=(((1,), (1,)), ((), ())),
                preferred_element_type=f32) * inv_md_size                 # (1, H)
            pre = pre + md2pfc

            h_new = jnp.maximum(hidden * one_minus_alpha + pre * alpha, 0.0)
            act_ref[pl.ds(t, 1), :] = h_new                               # VMEM-resident
            return (h_new, mdinp, mdpost, wpfc2md, wmd2pfc)

        init = (jnp.zeros((1, H), f32),        # hidden (init_hidden)
                jnp.zeros((1, M), f32),        # MDinp (md.init_activity)
                jnp.zeros((1, M), f32),        # MDpostTrace
                wpfc2md0_ref[...],             # wPFC2MD^T (plastic, learned online)
                wmd2pfc0_ref[...])             # wMD2PFC  (plastic, learned online)
        lax.fori_loop(0, T, body, init, unroll=unroll)

        # Batched fc projection over all timesteps, single matmul after the loop.
        out_ref[...] = jnp.dot(act_ref[...], w_fc_ref[...],
                               preferred_element_type=f32) + b_fc_ref[...]

    return kernel


def rnn_md_forward(x, sub_id, params, *, sub_size, md_size,
                   dt=10.0, tau=100.0, md_dt=0.001):
    f32 = jnp.float32
    T, B, I = x.shape
    assert B == 1, "MDeffect path requires batch size 1"
    H = params["w_in"].shape[0]
    Dout = params["w_fc"].shape[0]
    M = md_size

    alpha = dt / tau                    # CTRNN alpha
    md_alpha = md_dt / (0.02 * 4)       # md_dt / tauMD, tauMD = tau(0.02) * tau_times(4)
    inv_tau_post = 1.0 / 1000.0         # 1 / tau_posttrace
    hebb_half = 0.5 * 0.0001            # 0.5 * Hebb_learning_rate
    inv_md_size = 1.0 / M

    # Sub-population mask == MDpreTrace_binary; fold it into weights / biases on the host.
    mask = jnp.zeros((1, H), f32).at[0, sub_id * sub_size:(sub_id + 1) * sub_size].set(1.0)
    mask_col = jnp.reshape(mask, (H, 1))
    # Pre-broadcast the loop-invariant Hebbian column to (H, M) on the host so no
    # broadcast_in_dim is re-emitted inside the serial recurrence.
    delta_pre = jnp.broadcast_to(hebb_half * (mask_col - 0.5), (H, M)).astype(f32)

    w_in_masked = (params["w_in"].T.astype(f32) * mask)             # (I, H) masked columns
    b_comb = (params["b_in"].reshape(1, H).astype(f32) * mask
              + params["b_hh"].reshape(1, H).astype(f32))           # (1, H) combined bias
    w_hh_t = params["w_hh"].T.astype(f32)                           # (H, H)
    w_fc_t = params["w_fc"].T.astype(f32)                           # (H, Dout)
    b_fc = params["b_fc"].reshape(1, Dout).astype(f32)
    wpfc2md_t = params["wPFC2MD"].T.astype(f32)                     # (H, M)
    wmd2pfc = params["wMD2PFC"].astype(f32)                         # (H, M) native

    x2d = x.reshape(T, I).astype(f32)

    unroll = True if T <= 16 else 4
    kernel = make_rnn_md_kernel(T, alpha, md_alpha, inv_tau_post, inv_md_size, unroll)

    # Explicit scoped-VMEM budget sized from the actual buffers (+ headroom), capped at
    # v7x's 64 MiB per-TC physical VMEM so the limit is valid on every generation.
    n_elems = (T * I + I * H + H + H * H + H * Dout + Dout
               + 3 * H * M + T * Dout + T * H)
    vmem_limit = max(int(n_elems * 4 * 3) + (2 << 20), 32 << 20)
    vmem_limit = min(vmem_limit, 64 << 20)

    out2d, act2d = pl.pallas_call(
        kernel,
        out_shape=(jax.ShapeDtypeStruct((T, Dout), f32),
                   jax.ShapeDtypeStruct((T, H), f32)),
        compiler_params=pltpu.CompilerParams(vmem_limit_bytes=vmem_limit),
    )(x2d, w_in_masked, b_comb, w_hh_t, w_fc_t, b_fc, delta_pre, wpfc2md_t, wmd2pfc)

    return out2d.reshape(T, 1, Dout), act2d.reshape(T, 1, H)


def reference_forward(x, sub_id, params, *, sub_size, md_size,
                      dt=10.0, tau=100.0, md_dt=0.001):
    """Plain numpy re-implementation mirroring the PyTorch/np module (for validation)."""
    x = np.asarray(x, np.float32)
    T, _, _ = x.shape
    W_in = np.asarray(params["w_in"], np.float32)
    b_in = np.asarray(params["b_in"], np.float32)
    W_hh = np.asarray(params["w_hh"], np.float32)
    b_hh = np.asarray(params["b_hh"], np.float32)
    W_fc = np.asarray(params["w_fc"], np.float32)
    b_fc = np.asarray(params["b_fc"], np.float32)
    wPFC2MD = np.asarray(params["wPFC2MD"], np.float32).copy()
    wMD2PFC = np.asarray(params["wMD2PFC"], np.float32).copy()
    H = W_in.shape[0]

    alpha = dt / tau
    oma = 1.0 - alpha
    tauMD = 0.02 * 4
    hidden = np.zeros(H, np.float32)
    MDinp = np.zeros(md_size, np.float32)
    MDpost = np.zeros(md_size, np.float32)
    mask = np.zeros(H, np.float32)
    mask[sub_id * sub_size:(sub_id + 1) * sub_size] = 1.0

    def wta(v):
        out = np.zeros(md_size, np.float32)
        thr = np.median(np.sort(v)[-2:])   # num_active == 1
        out[v >= thr] = 1.0
        return out

    acts, outs = [], []
    for t in range(T):
        xt = x[t, 0]
        ext = (W_in @ xt + b_in) * mask
        rec = W_hh @ hidden + b_hh
        pre = ext + rec
        MDinp = MDinp + md_dt / tauMD * (-MDinp + wPFC2MD @ hidden)
        md_out = wta(MDinp)
        MDpost = MDpost + 1.0 / 1000.0 * (-MDpost + md_out)
        md_out_trace = wta(MDpost)
        delta = 0.5 * 1e-4 * np.outer(md_out_trace - 0.5, mask - 0.5)
        wPFC2MD = np.clip(wPFC2MD + delta, 0.0, 1.0)
        wMD2PFC = np.clip(wMD2PFC + delta.T, -1.0, 0.0)
        pre = pre + (wMD2PFC / md_size) @ md_out
        hidden = np.maximum(hidden * oma + pre * alpha, 0.0)
        acts.append(hidden.copy())
        outs.append(W_fc @ hidden + b_fc)
    return np.stack(outs)[:, None, :], np.stack(acts)[:, None, :]


if __name__ == "__main__":
    # RNN_MD(input_size=8, hidden_size=32, sub_size=8, output_size=4, num_task=4,
    #        MDeffect=True, md_size=8, md_active_size=1, md_dt=0.001, dt=10)
    input_size, hidden_size, sub_size, output_size = 8, 32, 8, 4
    md_size, md_active_size, md_dt = 8, 1, 0.001
    dt, tau = 10.0, 100.0
    seq_len, batch = 8, 1
    sub_id = 1

    key = jax.random.PRNGKey(0)
    ks = jax.random.split(key, 8)
    kin = 1.0 / np.sqrt(input_size)
    kh = 1.0 / np.sqrt(hidden_size)
    params = {
        "w_in": jax.random.uniform(ks[0], (hidden_size, input_size), jnp.float32, -kin, kin),
        "b_in": jax.random.uniform(ks[1], (hidden_size,), jnp.float32, -kin, kin),
        "w_hh": 0.5 * jnp.eye(hidden_size, dtype=jnp.float32),   # nn.init.eye_ then *= 0.5
        "b_hh": jax.random.uniform(ks[2], (hidden_size,), jnp.float32, -kh, kh),
        "w_fc": jax.random.uniform(ks[3], (output_size, hidden_size), jnp.float32, -kh, kh),
        "b_fc": jax.random.uniform(ks[4], (output_size,), jnp.float32, -kh, kh),
        "wPFC2MD": jax.random.normal(ks[5], (md_size, hidden_size), jnp.float32)
                   / np.sqrt(md_size * hidden_size),
        "wMD2PFC": jax.random.normal(ks[6], (hidden_size, md_size), jnp.float32)
                   / np.sqrt(md_size * hidden_size),
    }
    x = jax.random.normal(ks[7], (seq_len, batch, input_size), jnp.float32)

    out, act = rnn_md_forward(x, sub_id, params, sub_size=sub_size, md_size=md_size,
                              dt=dt, tau=tau, md_dt=md_dt)
    out = jax.block_until_ready(out)
    act = jax.block_until_ready(act)

    ref_out, ref_act = reference_forward(x, sub_id, params, sub_size=sub_size,
                                         md_size=md_size, dt=dt, tau=tau, md_dt=md_dt)
    np.testing.assert_allclose(np.asarray(act), ref_act, rtol=1e-4, atol=1e-4)
    np.testing.assert_allclose(np.asarray(out), ref_out, rtol=1e-4, atol=1e-4)
    print("KERNEL_OK")
</pallas_src>

<mosaic_0001>
module attributes {stable_mosaic.version = 11 : i64} {
  func.func @kernel(%arg0: memref<8x8xf32, #tpu.memory_space<vmem>>, %arg1: memref<8x32xf32, #tpu.memory_space<vmem>>, %arg2: memref<1x32xf32, #tpu.memory_space<vmem>>, %arg3: memref<32x32xf32, #tpu.memory_space<vmem>>, %arg4: memref<32x4xf32, #tpu.memory_space<vmem>>, %arg5: memref<1x4xf32, #tpu.memory_space<vmem>>, %arg6: memref<32x8xf32, #tpu.memory_space<vmem>>, %arg7: memref<32x8xf32, #tpu.memory_space<vmem>>, %arg8: memref<32x8xf32, #tpu.memory_space<vmem>>, %arg9: memref<8x4xf32, #tpu.memory_space<vmem>>, %arg10: memref<8x32xf32, #tpu.memory_space<vmem>>) attributes {dimension_semantics = [], scalar_prefetch = 0 : i64, scratch_operands = 0 : i64, tpu.core_type = #tpu.core_type<tc>} {
    %c0 = arith.constant 0 : index
    %c0_0 = arith.constant 0 : index
    %0 = vector.load %arg3[%c0, %c0_0] : memref<32x32xf32, #tpu.memory_space<vmem>>, vector<32x32xf32>
    %c0_1 = arith.constant 0 : index
    %c0_2 = arith.constant 0 : index
    %1 = vector.load %arg6[%c0_1, %c0_2] : memref<32x8xf32, #tpu.memory_space<vmem>>, vector<32x8xf32>
    %c0_3 = arith.constant 0 : index
    %c0_4 = arith.constant 0 : index
    %2 = vector.load %arg0[%c0_3, %c0_4] : memref<8x8xf32, #tpu.memory_space<vmem>>, vector<8x8xf32>
    %c0_5 = arith.constant 0 : index
    %c0_6 = arith.constant 0 : index
    %3 = vector.load %arg1[%c0_5, %c0_6] : memref<8x32xf32, #tpu.memory_space<vmem>>, vector<8x32xf32>
    %cst = arith.constant dense<0.000000e+00> : vector<8x32xf32>
    %4 = tpu.matmul %2, %3, %cst {dimension_numbers = #tpu.dot_dimension_numbers<[1], [0], [0], [1], [0, 0, 1, 1], [], []>} : vector<8x8xf32>, vector<8x32xf32>, vector<8x32xf32> -> vector<8x32xf32>
    %c0_7 = arith.constant 0 : index
    %c0_8 = arith.constant 0 : index
    %5 = vector.load %arg2[%c0_7, %c0_8] : memref<1x32xf32, #tpu.memory_space<vmem>>, vector<1x32xf32>
    %6 = vector.broadcast %5 : vector<1x32xf32> to vector<8x32xf32>
    %7 = arith.addf %4, %6 : vector<8x32xf32>
    %c0_9 = arith.constant 0 : index
    %c0_10 = arith.constant 0 : index
    %8 = vector.load %arg10[%c0_9, %c0_10] : memref<8x32xf32, #tpu.memory_space<vmem>>, vector<8x32xf32>
    tpu.vector_store %arg10[%c0_9, %c0_10], %7 {strides = array<i32>} : memref<8x32xf32, #tpu.memory_space<vmem>>, vector<8x32xf32>,
    %cst_11 = arith.constant 0.000000e+00 : f32
    %9 = vector.broadcast %cst_11 : f32 to vector<1x32xf32>
    %cst_12 = arith.constant 0.000000e+00 : f32
    %10 = vector.broadcast %cst_12 : f32 to vector<1x8xf32>
    %cst_13 = arith.constant 0.000000e+00 : f32
    %11 = vector.broadcast %cst_13 : f32 to vector<1x8xf32>
    %c0_14 = arith.constant 0 : index
    %c0_15 = arith.constant 0 : index
    %12 = vector.load %arg7[%c0_14, %c0_15] : memref<32x8xf32, #tpu.memory_space<vmem>>, vector<32x8xf32>
    %c0_16 = arith.constant 0 : index
    %c0_17 = arith.constant 0 : index
    %13 = vector.load %arg8[%c0_16, %c0_17] : memref<32x8xf32, #tpu.memory_space<vmem>>, vector<32x8xf32>
    %c0_i32 = arith.constant 0 : i32
    %14 = arith.index_cast %c0_i32 : i32 to index
    %c0_18 = arith.constant 0 : index
    %15 = vector.load %arg10[%14, %c0_18] : memref<8x32xf32, #tpu.memory_space<vmem>>, vector<1x32xf32>
    %cst_19 = arith.constant dense<0.000000e+00> : vector<1x32xf32>
    %16 = tpu.matmul %9, %0, %cst_19 {dimension_numbers = #tpu.dot_dimension_numbers<[1], [0], [0], [1], [0, 0, 1, 1], [], []>} : vector<1x32xf32>, vector<32x32xf32>, vector<1x32xf32> -> vector<1x32xf32>
    %17 = arith.addf %15, %16 : vector<1x32xf32>
    %cst_20 = arith.constant 0.000000e+00 : f32
    %18 = vector.broadcast %cst_20 : f32 to vector<1x8xf32>
    %19 = arith.subf %18, %10 : vector<1x8xf32>
    %cst_21 = arith.constant dense<0.000000e+00> : vector<1x8xf32>
    %20 = tpu.matmul %9, %12, %cst_21 {dimension_numbers = #tpu.dot_dimension_numbers<[1], [0], [0], [1], [0, 0, 1, 1], [], []>} : vector<1x32xf32>, vector<32x8xf32>, vector<1x8xf32> -> vector<1x8xf32>
    %21 = arith.addf %19, %20 : vector<1x8xf32>
    %cst_22 = arith.constant 1.250000e-02 : f32
    %22 = vector.broadcast %cst_22 : f32 to vector<1x8xf32>
    %23 = arith.mulf %22, %21 : vector<1x8xf32>
    %24 = arith.addf %10, %23 : vector<1x8xf32>
    %25 = vector.shape_cast %24 : vector<1x8xf32> to vector<1x1x8xf32>
    %cst_23 = arith.constant dense<0xFF800000> : vector<1xf32>
    %26 = vector.multi_reduction <maximumf>, %25, %cst_23 [1, 2] : vector<1x1x8xf32> to vector<1xf32>
    %27 = vector.shape_cast %26 : vector<1xf32> to vector<1x1x1xf32>
    %28 = vector.extract %27[0, 0, 0] : f32 from vector<1x1x1xf32>
    %29 = vector.broadcast %28 : f32 to vector<1x8xf32>
    %30 = arith.cmpf oge, %24, %29 : vector<1x8xf32>
    %cst_24 = arith.constant 1.000000e+00 : f32
    %cst_25 = arith.constant 0.000000e+00 : f32
    %31 = vector.broadcast %cst_24 : f32 to vector<1x8xf32>
    %32 = vector.broadcast %cst_25 : f32 to vector<1x8xf32>
    %33 = arith.select %30, %31, %32 : vector<1x8xi1>, vector<1x8xf32>
    %cst_26 = arith.constant 0.000000e+00 : f32
    %34 = vector.broadcast %cst_26 : f32 to vector<1x8xf32>
    %35 = arith.subf %34, %11 : vector<1x8xf32>
    %36 = arith.addf %35, %33 : vector<1x8xf32>
    %cst_27 = arith.constant 1.000000e-03 : f32
    %37 = vector.broadcast %cst_27 : f32 to vector<1x8xf32>
    %38 = arith.mulf %37, %36 : vector<1x8xf32>
    %39 = arith.addf %11, %38 : vector<1x8xf32>
    %40 = vector.shape_cast %39 : vector<1x8xf32> to vector<1x1x8xf32>
    %cst_28 = arith.constant dense<0xFF800000> : vector<1xf32>
    %41 = vector.multi_reduction <maximumf>, %40, %cst_28 [1, 2] : vector<1x1x8xf32> to vector<1xf32>
    %42 = vector.shape_cast %41 : vector<1xf32> to vector<1x1x1xf32>
    %43 = vector.extract %42[0, 0, 0] : f32 from vector<1x1x1xf32>
    %44 = vector.broadcast %43 : f32 to vector<1x8xf32>
    %45 = arith.cmpf oge, %39, %44 : vector<1x8xf32>
    %cst_29 = arith.constant 1.000000e+00 : f32
    %cst_30 = arith.constant 0.000000e+00 : f32
    %46 = vector.broadcast %cst_29 : f32 to vector<1x8xf32>
    %47 = vector.broadcast %cst_30 : f32 to vector<1x8xf32>
    %48 = arith.select %45, %46, %47 : vector<1x8xi1>, vector<1x8xf32>
    %cst_31 = arith.constant 5.000000e-01 : f32
    %49 = vector.broadcast %cst_31 : f32 to vector<1x8xf32>
    %50 = arith.subf %48, %49 : vector<1x8xf32>
    %51 = vector.broadcast %50 : vector<1x8xf32> to vector<32x8xf32>
    %52 = arith.mulf %1, %51 : vector<32x8xf32>
    %53 = arith.addf %12, %52 : vector<32x8xf32>
    %cst_32 = arith.constant 0.000000e+00 : f32
    %cst_33 = arith.constant 1.000000e+00 : f32
    %54 = vector.broadcast %cst_32 : f32 to vector<32x8xf32>
    %55 = arith.maximumf %54, %53 : vector<32x8xf32>
    %56 = vector.broadcast %cst_33 : f32 to vector<32x8xf32>
    %57 = arith.minimumf %56, %55 : vector<32x8xf32>
    %58 = arith.addf %13, %52 : vector<32x8xf32>
    %cst_34 = arith.constant -1.000000e+00 : f32
    %cst_35 = arith.constant 0.000000e+00 : f32
    %59 = vector.broadcast %cst_34 : f32 to vector<32x8xf32>
    %60 = arith.maximumf %59, %58 : vector<32x8xf32>
    %61 = vector.broadcast %cst_35 : f32 to vector<32x8xf32>
    %62 = arith.minimumf %61, %60 : vector<32x8xf32>
    %cst_36 = arith.constant dense<0.000000e+00> : vector<1x32xf32>
    %63 = tpu.matmul %33, %62, %cst_36 {dimension_numbers = #tpu.dot_dimension_numbers<[1], [1], [0], [0], [0, 0, 1, 0], [], []>} : vector<1x8xf32>, vector<32x8xf32>, vector<1x32xf32> -> vector<1x32xf32>
    %cst_37 = arith.constant 1.250000e-01 : f32
    %64 = vector.broadcast %cst_37 : f32 to vector<1x32xf32>
    %65 = arith.mulf %63, %64 : vector<1x32xf32>
    %66 = arith.addf %17, %65 : vector<1x32xf32>
    %cst_38 = arith.constant 0.899999976 : f32
    %67 = vector.broadcast %cst_38 : f32 to vector<1x32xf32>
    %68 = arith.mulf %9, %67 : vector<1x32xf32>
    %cst_39 = arith.constant 1.000000e-01 : f32
    %69 = vector.broadcast %cst_39 : f32 to vector<1x32xf32>
    %70 = arith.mulf %66, %69 : vector<1x32xf32>
    %71 = arith.addf %68, %70 : vector<1x32xf32>
    %cst_40 = arith.constant 0.000000e+00 : f32
    %72 = vector.broadcast %cst_40 : f32 to vector<1x32xf32>
    %73 = arith.maximumf %71, %72 : vector<1x32xf32>
    %74 = arith.index_cast %c0_i32 : i32 to index
    %c0_41 = arith.constant 0 : index
    %75 = vector.load %arg10[%74, %c0_41] : memref<8x32xf32, #tpu.memory_space<vmem>>, vector<1x32xf32>
    tpu.vector_store %arg10[%74, %c0_41], %73 {strides = array<i32>} : memref<8x32xf32, #tpu.memory_space<vmem>>, vector<1x32xf32>,
    %c1_i32 = arith.constant 1 : i32
    %76 = arith.index_cast %c1_i32 : i32 to index
    %c0_42 = arith.constant 0 : index
    %77 = vector.load %arg10[%76, %c0_42] : memref<8x32xf32, #tpu.memory_space<vmem>>, vector<1x32xf32>
    %cst_43 = arith.constant dense<0.000000e+00> : vector<1x32xf32>
    %78 = tpu.matmul %73, %0, %cst_43 {dimension_numbers = #tpu.dot_dimension_numbers<[1], [0], [0], [1], [0, 0, 1, 1], [], []>} : vector<1x32xf32>, vector<32x32xf32>, vector<1x32xf32> -> vector<1x32xf32>
    %79 = arith.addf %77, %78 : vector<1x32xf32>
    %cst_44 = arith.constant 0.000000e+00 : f32
    %80 = vector.broadcast %cst_44 : f32 to vector<1x8xf32>
    %81 = arith.subf %80, %24 : vector<1x8xf32>
    %cst_45 = arith.constant dense<0.000000e+00> : vector<1x8xf32>
    %82 = tpu.matmul %73, %57, %cst_45 {dimension_numbers = #tpu.dot_dimension_numbers<[1], [0], [0], [1], [0, 0, 1, 1], [], []>} : vector<1x32xf32>, vector<32x8xf32>, vector<1x8xf32> -> vector<1x8xf32>
    %83 = arith.addf %81, %82 : vector<1x8xf32>
    %cst_46 = arith.constant 1.250000e-02 : f32
    %84 = vector.broadcast %cst_46 : f32 to vector<1x8xf32>
    %85 = arith.mulf %84, %83 : vector<1x8xf32>
    %86 = arith.addf %24, %85 : vector<1x8xf32>
    %87 = vector.shape_cast %86 : vector<1x8xf32> to vector<1x1x8xf32>
    %cst_47 = arith.constant dense<0xFF800000> : vector<1xf32>
    %88 = vector.multi_reduction <maximumf>, %87, %cst_47 [1, 2] : vector<1x1x8xf32> to vector<1xf32>
    %89 = vector.shape_cast %88 : vector<1xf32> to vector<1x1x1xf32>
    %90 = vector.extract %89[0, 0, 0] : f32 from vector<1x1x1xf32>
    %91 = vector.broadcast %90 : f32 to vector<1x8xf32>
    %92 = arith.cmpf oge, %86, %91 : vector<1x8xf32>
    %cst_48 = arith.constant 1.000000e+00 : f32
    %cst_49 = arith.constant 0.000000e+00 : f32
    %93 = vector.broadcast %cst_48 : f32 to vector<1x8xf32>
    %94 = vector.broadcast %cst_49 : f32 to vector<1x8xf32>
    %95 = arith.select %92, %93, %94 : vector<1x8xi1>, vector<1x8xf32>
    %cst_50 = arith.constant 0.000000e+00 : f32
    %96 = vector.broadcast %cst_50 : f32 to vector<1x8xf32>
    %97 = arith.subf %96, %39 : vector<1x8xf32>
    %98 = arith.addf %97, %95 : vector<1x8xf32>
    %cst_51 = arith.constant 1.000000e-03 : f32
    %99 = vector.broadcast %cst_51 : f32 to vector<1x8xf32>
    %100 = arith.mulf %99, %98 : vector<1x8xf32>
    %101 = arith.addf %39, %100 : vector<1x8xf32>
    %102 = vector.shape_cast %101 : vector<1x8xf32> to vector<1x1x8xf32>
    %cst_52 = arith.constant dense<0xFF800000> : vector<1xf32>
    %103 = vector.multi_reduction <maximumf>, %102, %cst_52 [1, 2] : vector<1x1x8xf32> to vector<1xf32>
    %104 = vector.shape_cast %103 : vector<1xf32> to vector<1x1x1xf32>
    %105 = vector.extract %104[0, 0, 0] : f32 from vector<1x1x1xf32>
    %106 = vector.broadcast %105 : f32 to vector<1x8xf32>
    %107 = arith.cmpf oge, %101, %106 : vector<1x8xf32>
    %cst_53 = arith.constant 1.000000e+00 : f32
    %cst_54 = arith.constant 0.000000e+00 : f32
    %108 = vector.broadcast %cst_53 : f32 to vector<1x8xf32>
    %109 = vector.broadcast %cst_54 : f32 to vector<1x8xf32>
    %110 = arith.select %107, %108, %109 : vector<1x8xi1>, vector<1x8xf32>
    %cst_55 = arith.constant 5.000000e-01 : f32
    %111 = vector.broadcast %cst_55 : f32 to vector<1x8xf32>
    %112 = arith.subf %110, %111 : vector<1x8xf32>
    %113 = vector.broadcast %112 : vector<1x8xf32> to vector<32x8xf32>
    %114 = arith.mulf %1, %113 : vector<32x8xf32>
    %115 = arith.addf %57, %114 : vector<32x8xf32>
    %cst_56 = arith.constant 0.000000e+00 : f32
    %cst_57 = arith.constant 1.000000e+00 : f32
    %116 = vector.broadcast %cst_56 : f32 to vector<32x8xf32>
    %117 = arith.maximumf %116, %115 : vector<32x8xf32>
    %118 = vector.broadcast %cst_57 : f32 to vector<32x8xf32>
    %119 = arith.minimumf %118, %117 : vector<32x8xf32>
    %120 = arith.addf %62, %114 : vector<32x8xf32>
    %cst_58 = arith.constant -1.000000e+00 : f32
    %cst_59 = arith.constant 0.000000e+00 : f32
    %121 = vector.broadcast %cst_58 : f32 to vector<32x8xf32>
    %122 = arith.maximumf %121, %120 : vector<32x8xf32>
    %123 = vector.broadcast %cst_59 : f32 to vector<32x8xf32>
    %124 = arith.minimumf %123, %122 : vector<32x8xf32>
    %cst_60 = arith.constant dense<0.000000e+00> : vector<1x32xf32>
    %125 = tpu.matmul %95, %124, %cst_60 {dimension_numbers = #tpu.dot_dimension_numbers<[1], [1], [0], [0], [0, 0, 1, 0], [], []>} : vector<1x8xf32>, vector<32x8xf32>, vector<1x32xf32> -> vector<1x32xf32>
    %cst_61 = arith.constant 1.250000e-01 : f32
    %126 = vector.broadcast %cst_61 : f32 to vector<1x32xf32>
    %127 = arith.mulf %125, %126 : vector<1x32xf32>
    %128 = arith.addf %79, %127 : vector<1x32xf32>
    %cst_62 = arith.constant 0.899999976 : f32
    %129 = vector.broadcast %cst_62 : f32 to vector<1x32xf32>
    %130 = arith.mulf %73, %129 : vector<1x32xf32>
    %cst_63 = arith.constant 1.000000e-01 : f32
    %131 = vector.broadcast %cst_63 : f32 to vector<1x32xf32>
    %132 = arith.mulf %128, %131 : vector<1x32xf32>
    %133 = arith.addf %130, %132 : vector<1x32xf32>
    %cst_64 = arith.constant 0.000000e+00 : f32
    %134 = vector.broadcast %cst_64 : f32 to vector<1x32xf32>
    %135 = arith.maximumf %133, %134 : vector<1x32xf32>
    %136 = arith.index_cast %c1_i32 : i32 to index
    %c0_65 = arith.constant 0 : index
    %137 = vector.load %arg10[%136, %c0_65] : memref<8x32xf32, #tpu.memory_space<vmem>>, vector<1x32xf32>
    tpu.vector_store %arg10[%136, %c0_65], %135 {strides = array<i32>} : memref<8x32xf32, #tpu.memory_space<vmem>>, vector<1x32xf32>,
    %c2_i32 = arith.constant 2 : i32
    %138 = arith.index_cast %c2_i32 : i32 to index
    %c0_66 = arith.constant 0 : index
    %139 = vector.load %arg10[%138, %c0_66] : memref<8x32xf32, #tpu.memory_space<vmem>>, vector<1x32xf32>
    %cst_67 = arith.constant dense<0.000000e+00> : vector<1x32xf32>
    %140 = tpu.matmul %135, %0, %cst_67 {dimension_numbers = #tpu.dot_dimension_numbers<[1], [0], [0], [1], [0, 0, 1, 1], [], []>} : vector<1x32xf32>, vector<32x32xf32>, vector<1x32xf32> -> vector<1x32xf32>
    %141 = arith.addf %139, %140 : vector<1x32xf32>
    %cst_68 = arith.constant 0.000000e+00 : f32
    %142 = vector.broadcast %cst_68 : f32 to vector<1x8xf32>
    %143 = arith.subf %142, %86 : vector<1x8xf32>
    %cst_69 = arith.constant dense<0.000000e+00> : vector<1x8xf32>
    %144 = tpu.matmul %135, %119, %cst_69 {dimension_numbers = #tpu.dot_dimension_numbers<[1], [0], [0], [1], [0, 0, 1, 1], [], []>} : vector<1x32xf32>, vector<32x8xf32>, vector<1x8xf32> -> vector<1x8xf32>
    %145 = arith.addf %143, %144 : vector<1x8xf32>
    %cst_70 = arith.constant 1.250000e-02 : f32
    %146 = vector.broadcast %cst_70 : f32 to vector<1x8xf32>
    %147 = arith.mulf %146, %145 : vector<1x8xf32>
    %148 = arith.addf %86, %147 : vector<1x8xf32>
    %149 = vector.shape_cast %148 : vector<1x8xf32> to vector<1x1x8xf32>
    %cst_71 = arith.constant dense<0xFF800000> : vector<1xf32>
    %150 = vector.multi_reduction <maximumf>, %149, %cst_71 [1, 2] : vector<1x1x8xf32> to vector<1xf32>
    %151 = vector.shape_cast %150 : vector<1xf32> to vector<1x1x1xf32>
    %152 = vector.extract %151[0, 0, 0] : f32 from vector<1x1x1xf32>
    %153 = vector.broadcast %152 : f32 to vector<1x8xf32>
    %154 = arith.cmpf oge, %148, %153 : vector<1x8xf32>
    %cst_72 = arith.constant 1.000000e+00 : f32
    %cst_73 = arith.constant 0.000000e+00 : f32
    %155 = vector.broadcast %cst_72 : f32 to vector<1x8xf32>
    %156 = vector.broadcast %cst_73 : f32 to vector<1x8xf32>
    %157 = arith.select %154, %155, %156 : vector<1x8xi1>, vector<1x8xf32>
    %cst_74 = arith.constant 0.000000e+00 : f32
    %158 = vector.broadcast %cst_74 : f32 to vector<1x8xf32>
    %159 = arith.subf %158, %101 : vector<1x8xf32>
    %160 = arith.addf %159, %157 : vector<1x8xf32>
    %cst_75 = arith.constant 1.000000e-03 : f32
    %161 = vector.broadcast %cst_75 : f32 to vector<1x8xf32>
    %162 = arith.mulf %161, %160 : vector<1x8xf32>
    %163 = arith.addf %101, %162 : vector<1x8xf32>
    %164 = vector.shape_cast %163 : vector<1x8xf32> to vector<1x1x8xf32>
    %cst_76 = arith.constant dense<0xFF800000> : vector<1xf32>
    %165 = vector.multi_reduction <maximumf>, %164, %cst_76 [1, 2] : vector<1x1x8xf32> to vector<1xf32>
    %166 = vector.shape_cast %165 : vector<1xf32> to vector<1x1x1xf32>
    %167 = vector.extract %166[0, 0, 0] : f32 from vector<1x1x1xf32>
    %168 = vector.broadcast %167 : f32 to vector<1x8xf32>
    %169 = arith.cmpf oge, %163, %168 : vector<1x8xf32>
    %cst_77 = arith.constant 1.000000e+00 : f32
    %cst_78 = arith.constant 0.000000e+00 : f32
    %170 = vector.broadcast %cst_77 : f32 to vector<1x8xf32>
    %171 = vector.broadcast %cst_78 : f32 to vector<1x8xf32>
    %172 = arith.select %169, %170, %171 : vector<1x8xi1>, vector<1x8xf32>
    %cst_79 = arith.constant 5.000000e-01 : f32
    %173 = vector.broadcast %cst_79 : f32 to vector<1x8xf32>
    %174 = arith.subf %172, %173 : vector<1x8xf32>
    %175 = vector.broadcast %174 : vector<1x8xf32> to vector<32x8xf32>
    %176 = arith.mulf %1, %175 : vector<32x8xf32>
    %177 = arith.addf %119, %176 : vector<32x8xf32>
    %cst_80 = arith.constant 0.000000e+00 : f32
    %cst_81 = arith.constant 1.000000e+00 : f32
    %178 = vector.broadcast %cst_80 : f32 to vector<32x8xf32>
    %179 = arith.maximumf %178, %177 : vector<32x8xf32>
    %180 = vector.broadcast %cst_81 : f32 to vector<32x8xf32>
    %181 = arith.minimumf %180, %179 : vector<32x8xf32>
    %182 = arith.addf %124, %176 : vector<32x8xf32>
    %cst_82 = arith.constant -1.000000e+00 : f32
    %cst_83 = arith.constant 0.000000e+00 : f32
    %183 = vector.broadcast %cst_82 : f32 to vector<32x8xf32>
    %184 = arith.maximumf %183, %182 : vector<32x8xf32>
    %185 = vector.broadcast %cst_83 : f32 to vector<32x8xf32>
    %186 = arith.minimumf %185, %184 : vector<32x8xf32>
    %cst_84 = arith.constant dense<0.000000e+00> : vector<1x32xf32>
    %187 = tpu.matmul %157, %186, %cst_84 {dimension_numbers = #tpu.dot_dimension_numbers<[1], [1], [0], [0], [0, 0, 1, 0], [], []>} : vector<1x8xf32>, vector<32x8xf32>, vector<1x32xf32> -> vector<1x32xf32>
    %cst_85 = arith.constant 1.250000e-01 : f32
    %188 = vector.broadcast %cst_85 : f32 to vector<1x32xf32>
    %189 = arith.mulf %187, %188 : vector<1x32xf32>
    %190 = arith.addf %141, %189 : vector<1x32xf32>
    %cst_86 = arith.constant 0.899999976 : f32
    %191 = vector.broadcast %cst_86 : f32 to vector<1x32xf32>
    %192 = arith.mulf %135, %191 : vector<1x32xf32>
    %cst_87 = arith.constant 1.000000e-01 : f32
    %193 = vector.broadcast %cst_87 : f32 to vector<1x32xf32>
    %194 = arith.mulf %190, %193 : vector<1x32xf32>
    %195 = arith.addf %192, %194 : vector<1x32xf32>
    %cst_88 = arith.constant 0.000000e+00 : f32
    %196 = vector.broadcast %cst_88 : f32 to vector<1x32xf32>
    %197 = arith.maximumf %195, %196 : vector<1x32xf32>
    %198 = arith.index_cast %c2_i32 : i32 to index
    %c0_89 = arith.constant 0 : index
    %199 = vector.load %arg10[%198, %c0_89] : memref<8x32xf32, #tpu.memory_space<vmem>>, vector<1x32xf32>
    tpu.vector_store %arg10[%198, %c0_89], %197 {strides = array<i32>} : memref<8x32xf32, #tpu.memory_space<vmem>>, vector<1x32xf32>,
    %c3_i32 = arith.constant 3 : i32
    %200 = arith.index_cast %c3_i32 : i32 to index
    %c0_90 = arith.constant 0 : index
    %201 = vector.load %arg10[%200, %c0_90] : memref<8x32xf32, #tpu.memory_space<vmem>>, vector<1x32xf32>
    %cst_91 = arith.constant dense<0.000000e+00> : vector<1x32xf32>
    %202 = tpu.matmul %197, %0, %cst_91 {dimension_numbers = #tpu.dot_dimension_numbers<[1], [0], [0], [1], [0, 0, 1, 1], [], []>} : vector<1x32xf32>, vector<32x32xf32>, vector<1x32xf32> -> vector<1x32xf32>
    %203 = arith.addf %201, %202 : vector<1x32xf32>
    %cst_92 = arith.constant 0.000000e+00 : f32
    %204 = vector.broadcast %cst_92 : f32 to vector<1x8xf32>
    %205 = arith.subf %204, %148 : vector<1x8xf32>
    %cst_93 = arith.constant dense<0.000000e+00> : vector<1x8xf32>
    %206 = tpu.matmul %197, %181, %cst_93 {dimension_numbers = #tpu.dot_dimension_numbers<[1], [0], [0], [1], [0, 0, 1, 1], [], []>} : vector<1x32xf32>, vector<32x8xf32>, vector<1x8xf32> -> vector<1x8xf32>
    %207 = arith.addf %205, %206 : vector<1x8xf32>
    %cst_94 = arith.constant 1.250000e-02 : f32
    %208 = vector.broadcast %cst_94 : f32 to vector<1x8xf32>
    %209 = arith.mulf %208, %207 : vector<1x8xf32>
    %210 = arith.addf %148, %209 : vector<1x8xf32>
    %211 = vector.shape_cast %210 : vector<1x8xf32> to vector<1x1x8xf32>
    %cst_95 = arith.constant dense<0xFF800000> : vector<1xf32>
    %212 = vector.multi_reduction <maximumf>, %211, %cst_95 [1, 2] : vector<1x1x8xf32> to vector<1xf32>
    %213 = vector.shape_cast %212 : vector<1xf32> to vector<1x1x1xf32>
    %214 = vector.extract %213[0, 0, 0] : f32 from vector<1x1x1xf32>
    %215 = vector.broadcast %214 : f32 to vector<1x8xf32>
    %216 = arith.cmpf oge, %210, %215 : vector<1x8xf32>
    %cst_96 = arith.constant 1.000000e+00 : f32
    %cst_97 = arith.constant 0.000000e+00 : f32
    %217 = vector.broadcast %cst_96 : f32 to vector<1x8xf32>
    %218 = vector.broadcast %cst_97 : f32 to vector<1x8xf32>
    %219 = arith.select %216, %217, %218 : vector<1x8xi1>, vector<1x8xf32>
    %cst_98 = arith.constant 0.000000e+00 : f32
    %220 = vector.broadcast %cst_98 : f32 to vector<1x8xf32>
    %221 = arith.subf %220, %163 : vector<1x8xf32>
    %222 = arith.addf %221, %219 : vector<1x8xf32>
    %cst_99 = arith.constant 1.000000e-03 : f32
    %223 = vector.broadcast %cst_99 : f32 to vector<1x8xf32>
    %224 = arith.mulf %223, %222 : vector<1x8xf32>
    %225 = arith.addf %163, %224 : vector<1x8xf32>
    %226 = vector.shape_cast %225 : vector<1x8xf32> to vector<1x1x8xf32>
    %cst_100 = arith.constant dense<0xFF800000> : vector<1xf32>
    %227 = vector.multi_reduction <maximumf>, %226, %cst_100 [1, 2] : vector<1x1x8xf32> to vector<1xf32>
    %228 = vector.shape_cast %227 : vector<1xf32> to vector<1x1x1xf32>
    %229 = vector.extract %228[0, 0, 0] : f32 from vector<1x1x1xf32>
    %230 = vector.broadcast %229 : f32 to vector<1x8xf32>
    %231 = arith.cmpf oge, %225, %230 : vector<1x8xf32>
    %cst_101 = arith.constant 1.000000e+00 : f32
    %cst_102 = arith.constant 0.000000e+00 : f32
    %232 = vector.broadcast %cst_101 : f32 to vector<1x8xf32>
    %233 = vector.broadcast %cst_102 : f32 to vector<1x8xf32>
    %234 = arith.select %231, %232, %233 : vector<1x8xi1>, vector<1x8xf32>
    %cst_103 = arith.constant 5.000000e-01 : f32
    %235 = vector.broadcast %cst_103 : f32 to vector<1x8xf32>
    %236 = arith.subf %234, %235 : vector<1x8xf32>
    %237 = vector.broadcast %236 : vector<1x8xf32> to vector<32x8xf32>
    %238 = arith.mulf %1, %237 : vector<32x8xf32>
    %239 = arith.addf %181, %238 : vector<32x8xf32>
    %cst_104 = arith.constant 0.000000e+00 : f32
    %cst_105 = arith.constant 1.000000e+00 : f32
    %240 = vector.broadcast %cst_104 : f32 to vector<32x8xf32>
    %241 = arith.maximumf %240, %239 : vector<32x8xf32>
    %242 = vector.broadcast %cst_105 : f32 to vector<32x8xf32>
    %243 = arith.minimumf %242, %241 : vector<32x8xf32>
    %244 = arith.addf %186, %238 : vector<32x8xf32>
    %cst_106 = arith.constant -1.000000e+00 : f32
    %cst_107 = arith.constant 0.000000e+00 : f32
    %245 = vector.broadcast %cst_106 : f32 to vector<32x8xf32>
    %246 = arith.maximumf %245, %244 : vector<32x8xf32>
    %247 = vector.broadcast %cst_107 : f32 to vector<32x8xf32>
    %248 = arith.minimumf %247, %246 : vector<32x8xf32>
    %cst_108 = arith.constant dense<0.000000e+00> : vector<1x32xf32>
    %249 = tpu.matmul %219, %248, %cst_108 {dimension_numbers = #tpu.dot_dimension_numbers<[1], [1], [0], [0], [0, 0, 1, 0], [], []>} : vector<1x8xf32>, vector<32x8xf32>, vector<1x32xf32> -> vector<1x32xf32>
    %cst_109 = arith.constant 1.250000e-01 : f32
    %250 = vector.broadcast %cst_109 : f32 to vector<1x32xf32>
    %251 = arith.mulf %249, %250 : vector<1x32xf32>
    %252 = arith.addf %203, %251 : vector<1x32xf32>
    %cst_110 = arith.constant 0.899999976 : f32
    %253 = vector.broadcast %cst_110 : f32 to vector<1x32xf32>
    %254 = arith.mulf %197, %253 : vector<1x32xf32>
    %cst_111 = arith.constant 1.000000e-01 : f32
    %255 = vector.broadcast %cst_111 : f32 to vector<1x32xf32>
    %256 = arith.mulf %252, %255 : vector<1x32xf32>
    %257 = arith.addf %254, %256 : vector<1x32xf32>
    %cst_112 = arith.constant 0.000000e+00 : f32
    %258 = vector.broadcast %cst_112 : f32 to vector<1x32xf32>
    %259 = arith.maximumf %257, %258 : vector<1x32xf32>
    %260 = arith.index_cast %c3_i32 : i32 to index
    %c0_113 = arith.constant 0 : index
    %261 = vector.load %arg10[%260, %c0_113] : memref<8x32xf32, #tpu.memory_space<vmem>>, vector<1x32xf32>
    tpu.vector_store %arg10[%260, %c0_113], %259 {strides = array<i32>} : memref<8x32xf32, #tpu.memory_space<vmem>>, vector<1x32xf32>,
    %c4_i32 = arith.constant 4 : i32
    %262 = arith.index_cast %c4_i32 : i32 to index
    %c0_114 = arith.constant 0 : index
    %263 = vector.load %arg10[%262, %c0_114] : memref<8x32xf32, #tpu.memory_space<vmem>>, vector<1x32xf32>
    %cst_115 = arith.constant dense<0.000000e+00> : vector<1x32xf32>
    %264 = tpu.matmul %259, %0, %cst_115 {dimension_numbers = #tpu.dot_dimension_numbers<[1], [0], [0], [1], [0, 0, 1, 1], [], []>} : vector<1x32xf32>, vector<32x32xf32>, vector<1x32xf32> -> vector<1x32xf32>
    %265 = arith.addf %263, %264 : vector<1x32xf32>
    %cst_116 = arith.constant 0.000000e+00 : f32
    %266 = vector.broadcast %cst_116 : f32 to vector<1x8xf32>
    %267 = arith.subf %266, %210 : vector<1x8xf32>
    %cst_117 = arith.constant dense<0.000000e+00> : vector<1x8xf32>
    %268 = tpu.matmul %259, %243, %cst_117 {dimension_numbers = #tpu.dot_dimension_numbers<[1], [0], [0], [1], [0, 0, 1, 1], [], []>} : vector<1x32xf32>, vector<32x8xf32>, vector<1x8xf32> -> vector<1x8xf32>
    %269 = arith.addf %267, %268 : vector<1x8xf32>
    %cst_118 = arith.constant 1.250000e-02 : f32
    %270 = vector.broadcast %cst_118 : f32 to vector<1x8xf32>
    %271 = arith.mulf %270, %269 : vector<1x8xf32>
    %272 = arith.addf %210, %271 : vector<1x8xf32>
    %273 = vector.shape_cast %272 : vector<1x8xf32> to vector<1x1x8xf32>
    %cst_119 = arith.constant dense<0xFF800000> : vector<1xf32>
    %274 = vector.multi_reduction <maximumf>, %273, %cst_119 [1, 2] : vector<1x1x8xf32> to vector<1xf32>
    %275 = vector.shape_cast %274 : vector<1xf32> to vector<1x1x1xf32>
    %276 = vector.extract %275[0, 0, 0] : f32 from vector<1x1x1xf32>
    %277 = vector.broadcast %276 : f32 to vector<1x8xf32>
    %278 = arith.cmpf oge, %272, %277 : vector<1x8xf32>
    %cst_120 = arith.constant 1.000000e+00 : f32
    %cst_121 = arith.constant 0.000000e+00 : f32
    %279 = vector.broadcast %cst_120 : f32 to vector<1x8xf32>
    %280 = vector.broadcast %cst_121 : f32 to vector<1x8xf32>
    %281 = arith.select %278, %279, %280 : vector<1x8xi1>, vector<1x8xf32>
    %cst_122 = arith.constant 0.000000e+00 : f32
    %282 = vector.broadcast %cst_122 : f32 to vector<1x8xf32>
    %283 = arith.subf %282, %225 : vector<1x8xf32>
    %284 = arith.addf %283, %281 : vector<1x8xf32>
    %cst_123 = arith.constant 1.000000e-03 : f32
    %285 = vector.broadcast %cst_123 : f32 to vector<1x8xf32>
    %286 = arith.mulf %285, %284 : vector<1x8xf32>
    %287 = arith.addf %225, %286 : vector<1x8xf32>
    %288 = vector.shape_cast %287 : vector<1x8xf32> to vector<1x1x8xf32>
    %cst_124 = arith.constant dense<0xFF800000> : vector<1xf32>
    %289 = vector.multi_reduction <maximumf>, %288, %cst_124 [1, 2] : vector<1x1x8xf32> to vector<1xf32>
    %290 = vector.shape_cast %289 : vector<1xf32> to vector<1x1x1xf32>
    %291 = vector.extract %290[0, 0, 0] : f32 from vector<1x1x1xf32>
    %292 = vector.broadcast %291 : f32 to vector<1x8xf32>
    %293 = arith.cmpf oge, %287, %292 : vector<1x8xf32>
    %cst_125 = arith.constant 1.000000e+00 : f32
    %cst_126 = arith.constant 0.000000e+00 : f32
    %294 = vector.broadcast %cst_125 : f32 to vector<1x8xf32>
    %295 = vector.broadcast %cst_126 : f32 to vector<1x8xf32>
    %296 = arith.select %293, %294, %295 : vector<1x8xi1>, vector<1x8xf32>
    %cst_127 = arith.constant 5.000000e-01 : f32
    %297 = vector.broadcast %cst_127 : f32 to vector<1x8xf32>
    %298 = arith.subf %296, %297 : vector<1x8xf32>
    %299 = vector.broadcast %298 : vector<1x8xf32> to vector<32x8xf32>
    %300 = arith.mulf %1, %299 : vector<32x8xf32>
    %301 = arith.addf %243, %300 : vector<32x8xf32>
    %cst_128 = arith.constant 0.000000e+00 : f32
    %cst_129 = arith.constant 1.000000e+00 : f32
    %302 = vector.broadcast %cst_128 : f32 to vector<32x8xf32>
    %303 = arith.maximumf %302, %301 : vector<32x8xf32>
    %304 = vector.broadcast %cst_129 : f32 to vector<32x8xf32>
    %305 = arith.minimumf %304, %303 : vector<32x8xf32>
    %306 = arith.addf %248, %300 : vector<32x8xf32>
    %cst_130 = arith.constant -1.000000e+00 : f32
    %cst_131 = arith.constant 0.000000e+00 : f32
    %307 = vector.broadcast %cst_130 : f32 to vector<32x8xf32>
    %308 = arith.maximumf %307, %306 : vector<32x8xf32>
    %309 = vector.broadcast %cst_131 : f32 to vector<32x8xf32>
    %310 = arith.minimumf %309, %308 : vector<32x8xf32>
    %cst_132 = arith.constant dense<0.000000e+00> : vector<1x32xf32>
    %311 = tpu.matmul %281, %310, %cst_132 {dimension_numbers = #tpu.dot_dimension_numbers<[1], [1], [0], [0], [0, 0, 1, 0], [], []>} : vector<1x8xf32>, vector<32x8xf32>, vector<1x32xf32> -> vector<1x32xf32>
    %cst_133 = arith.constant 1.250000e-01 : f32
    %312 = vector.broadcast %cst_133 : f32 to vector<1x32xf32>
    %313 = arith.mulf %311, %312 : vector<1x32xf32>
    %314 = arith.addf %265, %313 : vector<1x32xf32>
    %cst_134 = arith.constant 0.899999976 : f32
    %315 = vector.broadcast %cst_134 : f32 to vector<1x32xf32>
    %316 = arith.mulf %259, %315 : vector<1x32xf32>
    %cst_135 = arith.constant 1.000000e-01 : f32
    %317 = vector.broadcast %cst_135 : f32 to vector<1x32xf32>
    %318 = arith.mulf %314, %317 : vector<1x32xf32>
    %319 = arith.addf %316, %318 : vector<1x32xf32>
    %cst_136 = arith.constant 0.000000e+00 : f32
    %320 = vector.broadcast %cst_136 : f32 to vector<1x32xf32>
    %321 = arith.maximumf %319, %320 : vector<1x32xf32>
    %322 = arith.index_cast %c4_i32 : i32 to index
    %c0_137 = arith.constant 0 : index
    %323 = vector.load %arg10[%322, %c0_137] : memref<8x32xf32, #tpu.memory_space<vmem>>, vector<1x32xf32>
    tpu.vector_store %arg10[%322, %c0_137], %321 {strides = array<i32>} : memref<8x32xf32, #tpu.memory_space<vmem>>, vector<1x32xf32>,
    %c5_i32 = arith.constant 5 : i32
    %324 = arith.index_cast %c5_i32 : i32 to index
    %c0_138 = arith.constant 0 : index
    %325 = vector.load %arg10[%324, %c0_138] : memref<8x32xf32, #tpu.memory_space<vmem>>, vector<1x32xf32>
    %cst_139 = arith.constant dense<0.000000e+00> : vector<1x32xf32>
    %326 = tpu.matmul %321, %0, %cst_139 {dimension_numbers = #tpu.dot_dimension_numbers<[1], [0], [0], [1], [0, 0, 1, 1], [], []>} : vector<1x32xf32>, vector<32x32xf32>, vector<1x32xf32> -> vector<1x32xf32>
    %327 = arith.addf %325, %326 : vector<1x32xf32>
    %cst_140 = arith.constant 0.000000e+00 : f32
    %328 = vector.broadcast %cst_140 : f32 to vector<1x8xf32>
    %329 = arith.subf %328, %272 : vector<1x8xf32>
    %cst_141 = arith.constant dense<0.000000e+00> : vector<1x8xf32>
    %330 = tpu.matmul %321, %305, %cst_141 {dimension_numbers = #tpu.dot_dimension_numbers<[1], [0], [0], [1], [0, 0, 1, 1], [], []>} : vector<1x32xf32>, vector<32x8xf32>, vector<1x8xf32> -> vector<1x8xf32>
    %331 = arith.addf %329, %330 : vector<1x8xf32>
    %cst_142 = arith.constant 1.250000e-02 : f32
    %332 = vector.broadcast %cst_142 : f32 to vector<1x8xf32>
    %333 = arith.mulf %332, %331 : vector<1x8xf32>
    %334 = arith.addf %272, %333 : vector<1x8xf32>
    %335 = vector.shape_cast %334 : vector<1x8xf32> to vector<1x1x8xf32>
    %cst_143 = arith.constant dense<0xFF800000> : vector<1xf32>
    %336 = vector.multi_reduction <maximumf>, %335, %cst_143 [1, 2] : vector<1x1x8xf32> to vector<1xf32>
    %337 = vector.shape_cast %336 : vector<1xf32> to vector<1x1x1xf32>
    %338 = vector.extract %337[0, 0, 0] : f32 from vector<1x1x1xf32>
    %339 = vector.broadcast %338 : f32 to vector<1x8xf32>
    %340 = arith.cmpf oge, %334, %339 : vector<1x8xf32>
    %cst_144 = arith.constant 1.000000e+00 : f32
    %cst_145 = arith.constant 0.000000e+00 : f32
    %341 = vector.broadcast %cst_144 : f32 to vector<1x8xf32>
    %342 = vector.broadcast %cst_145 : f32 to vector<1x8xf32>
    %343 = arith.select %340, %341, %342 : vector<1x8xi1>, vector<1x8xf32>
    %cst_146 = arith.constant 0.000000e+00 : f32
    %344 = vector.broadcast %cst_146 : f32 to vector<1x8xf32>
    %345 = arith.subf %344, %287 : vector<1x8xf32>
    %346 = arith.addf %345, %343 : vector<1x8xf32>
    %cst_147 = arith.constant 1.000000e-03 : f32
    %347 = vector.broadcast %cst_147 : f32 to vector<1x8xf32>
    %348 = arith.mulf %347, %346 : vector<1x8xf32>
    %349 = arith.addf %287, %348 : vector<1x8xf32>
    %350 = vector.shape_cast %349 : vector<1x8xf32> to vector<1x1x8xf32>
    %cst_148 = arith.constant dense<0xFF800000> : vector<1xf32>
    %351 = vector.multi_reduction <maximumf>, %350, %cst_148 [1, 2] : vector<1x1x8xf32> to vector<1xf32>
    %352 = vector.shape_cast %351 : vector<1xf32> to vector<1x1x1xf32>
    %353 = vector.extract %352[0, 0, 0] : f32 from vector<1x1x1xf32>
    %354 = vector.broadcast %353 : f32 to vector<1x8xf32>
    %355 = arith.cmpf oge, %349, %354 : vector<1x8xf32>
    %cst_149 = arith.constant 1.000000e+00 : f32
    %cst_150 = arith.constant 0.000000e+00 : f32
    %356 = vector.broadcast %cst_149 : f32 to vector<1x8xf32>
    %357 = vector.broadcast %cst_150 : f32 to vector<1x8xf32>
    %358 = arith.select %355, %356, %357 : vector<1x8xi1>, vector<1x8xf32>
    %cst_151 = arith.constant 5.000000e-01 : f32
    %359 = vector.broadcast %cst_151 : f32 to vector<1x8xf32>
    %360 = arith.subf %358, %359 : vector<1x8xf32>
    %361 = vector.broadcast %360 : vector<1x8xf32> to vector<32x8xf32>
    %362 = arith.mulf %1, %361 : vector<32x8xf32>
    %363 = arith.addf %305, %362 : vector<32x8xf32>
    %cst_152 = arith.constant 0.000000e+00 : f32
    %cst_153 = arith.constant 1.000000e+00 : f32
    %364 = vector.broadcast %cst_152 : f32 to vector<32x8xf32>
    %365 = arith.maximumf %364, %363 : vector<32x8xf32>
    %366 = vector.broadcast %cst_153 : f32 to vector<32x8xf32>
    %367 = arith.minimumf %366, %365 : vector<32x8xf32>
    %368 = arith.addf %310, %362 : vector<32x8xf32>
    %cst_154 = arith.constant -1.000000e+00 : f32
    %cst_155 = arith.constant 0.000000e+00 : f32
    %369 = vector.broadcast %cst_154 : f32 to vector<32x8xf32>
    %370 = arith.maximumf %369, %368 : vector<32x8xf32>
    %371 = vector.broadcast %cst_155 : f32 to vector<32x8xf32>
    %372 = arith.minimumf %371, %370 : vector<32x8xf32>
    %cst_156 = arith.constant dense<0.000000e+00> : vector<1x32xf32>
    %373 = tpu.matmul %343, %372, %cst_156 {dimension_numbers = #tpu.dot_dimension_numbers<[1], [1], [0], [0], [0, 0, 1, 0], [], []>} : vector<1x8xf32>, vector<32x8xf32>, vector<1x32xf32> -> vector<1x32xf32>
    %cst_157 = arith.constant 1.250000e-01 : f32
    %374 = vector.broadcast %cst_157 : f32 to vector<1x32xf32>
    %375 = arith.mulf %373, %374 : vector<1x32xf32>
    %376 = arith.addf %327, %375 : vector<1x32xf32>
    %cst_158 = arith.constant 0.899999976 : f32
    %377 = vector.broadcast %cst_158 : f32 to vector<1x32xf32>
    %378 = arith.mulf %321, %377 : vector<1x32xf32>
    %cst_159 = arith.constant 1.000000e-01 : f32
    %379 = vector.broadcast %cst_159 : f32 to vector<1x32xf32>
    %380 = arith.mulf %376, %379 : vector<1x32xf32>
    %381 = arith.addf %378, %380 : vector<1x32xf32>
    %cst_160 = arith.constant 0.000000e+00 : f32
    %382 = vector.broadcast %cst_160 : f32 to vector<1x32xf32>
    %383 = arith.maximumf %381, %382 : vector<1x32xf32>
    %384 = arith.index_cast %c5_i32 : i32 to index
    %c0_161 = arith.constant 0 : index
    %385 = vector.load %arg10[%384, %c0_161] : memref<8x32xf32, #tpu.memory_space<vmem>>, vector<1x32xf32>
    tpu.vector_store %arg10[%384, %c0_161], %383 {strides = array<i32>} : memref<8x32xf32, #tpu.memory_space<vmem>>, vector<1x32xf32>,
    %c6_i32 = arith.constant 6 : i32
    %386 = arith.index_cast %c6_i32 : i32 to index
    %c0_162 = arith.constant 0 : index
    %387 = vector.load %arg10[%386, %c0_162] : memref<8x32xf32, #tpu.memory_space<vmem>>, vector<1x32xf32>
    %cst_163 = arith.constant dense<0.000000e+00> : vector<1x32xf32>
    %388 = tpu.matmul %383, %0, %cst_163 {dimension_numbers = #tpu.dot_dimension_numbers<[1], [0], [0], [1], [0, 0, 1, 1], [], []>} : vector<1x32xf32>, vector<32x32xf32>, vector<1x32xf32> -> vector<1x32xf32>
    %389 = arith.addf %387, %388 : vector<1x32xf32>
    %cst_164 = arith.constant 0.000000e+00 : f32
    %390 = vector.broadcast %cst_164 : f32 to vector<1x8xf32>
    %391 = arith.subf %390, %334 : vector<1x8xf32>
    %cst_165 = arith.constant dense<0.000000e+00> : vector<1x8xf32>
    %392 = tpu.matmul %383, %367, %cst_165 {dimension_numbers = #tpu.dot_dimension_numbers<[1], [0], [0], [1], [0, 0, 1, 1], [], []>} : vector<1x32xf32>, vector<32x8xf32>, vector<1x8xf32> -> vector<1x8xf32>
    %393 = arith.addf %391, %392 : vector<1x8xf32>
    %cst_166 = arith.constant 1.250000e-02 : f32
    %394 = vector.broadcast %cst_166 : f32 to vector<1x8xf32>
    %395 = arith.mulf %394, %393 : vector<1x8xf32>
    %396 = arith.addf %334, %395 : vector<1x8xf32>
    %397 = vector.shape_cast %396 : vector<1x8xf32> to vector<1x1x8xf32>
    %cst_167 = arith.constant dense<0xFF800000> : vector<1xf32>
    %398 = vector.multi_reduction <maximumf>, %397, %cst_167 [1, 2] : vector<1x1x8xf32> to vector<1xf32>
    %399 = vector.shape_cast %398 : vector<1xf32> to vector<1x1x1xf32>
    %400 = vector.extract %399[0, 0, 0] : f32 from vector<1x1x1xf32>
    %401 = vector.broadcast %400 : f32 to vector<1x8xf32>
    %402 = arith.cmpf oge, %396, %401 : vector<1x8xf32>
    %cst_168 = arith.constant 1.000000e+00 : f32
    %cst_169 = arith.constant 0.000000e+00 : f32
    %403 = vector.broadcast %cst_168 : f32 to vector<1x8xf32>
    %404 = vector.broadcast %cst_169 : f32 to vector<1x8xf32>
    %405 = arith.select %402, %403, %404 : vector<1x8xi1>, vector<1x8xf32>
    %cst_170 = arith.constant 0.000000e+00 : f32
    %406 = vector.broadcast %cst_170 : f32 to vector<1x8xf32>
    %407 = arith.subf %406, %349 : vector<1x8xf32>
    %408 = arith.addf %407, %405 : vector<1x8xf32>
    %cst_171 = arith.constant 1.000000e-03 : f32
    %409 = vector.broadcast %cst_171 : f32 to vector<1x8xf32>
    %410 = arith.mulf %409, %408 : vector<1x8xf32>
    %411 = arith.addf %349, %410 : vector<1x8xf32>
    %412 = vector.shape_cast %411 : vector<1x8xf32> to vector<1x1x8xf32>
    %cst_172 = arith.constant dense<0xFF800000> : vector<1xf32>
    %413 = vector.multi_reduction <maximumf>, %412, %cst_172 [1, 2] : vector<1x1x8xf32> to vector<1xf32>
    %414 = vector.shape_cast %413 : vector<1xf32> to vector<1x1x1xf32>
    %415 = vector.extract %414[0, 0, 0] : f32 from vector<1x1x1xf32>
    %416 = vector.broadcast %415 : f32 to vector<1x8xf32>
    %417 = arith.cmpf oge, %411, %416 : vector<1x8xf32>
    %cst_173 = arith.constant 1.000000e+00 : f32
    %cst_174 = arith.constant 0.000000e+00 : f32
    %418 = vector.broadcast %cst_173 : f32 to vector<1x8xf32>
    %419 = vector.broadcast %cst_174 : f32 to vector<1x8xf32>
    %420 = arith.select %417, %418, %419 : vector<1x8xi1>, vector<1x8xf32>
    %cst_175 = arith.constant 5.000000e-01 : f32
    %421 = vector.broadcast %cst_175 : f32 to vector<1x8xf32>
    %422 = arith.subf %420, %421 : vector<1x8xf32>
    %423 = vector.broadcast %422 : vector<1x8xf32> to vector<32x8xf32>
    %424 = arith.mulf %1, %423 : vector<32x8xf32>
    %425 = arith.addf %367, %424 : vector<32x8xf32>
    %cst_176 = arith.constant 0.000000e+00 : f32
    %cst_177 = arith.constant 1.000000e+00 : f32
    %426 = vector.broadcast %cst_176 : f32 to vector<32x8xf32>
    %427 = arith.maximumf %426, %425 : vector<32x8xf32>
    %428 = vector.broadcast %cst_177 : f32 to vector<32x8xf32>
    %429 = arith.minimumf %428, %427 : vector<32x8xf32>
    %430 = arith.addf %372, %424 : vector<32x8xf32>
    %cst_178 = arith.constant -1.000000e+00 : f32
    %cst_179 = arith.constant 0.000000e+00 : f32
    %431 = vector.broadcast %cst_178 : f32 to vector<32x8xf32>
    %432 = arith.maximumf %431, %430 : vector<32x8xf32>
    %433 = vector.broadcast %cst_179 : f32 to vector<32x8xf32>
    %434 = arith.minimumf %433, %432 : vector<32x8xf32>
    %cst_180 = arith.constant dense<0.000000e+00> : vector<1x32xf32>
    %435 = tpu.matmul %405, %434, %cst_180 {dimension_numbers = #tpu.dot_dimension_numbers<[1], [1], [0], [0], [0, 0, 1, 0], [], []>} : vector<1x8xf32>, vector<32x8xf32>, vector<1x32xf32> -> vector<1x32xf32>
    %cst_181 = arith.constant 1.250000e-01 : f32
    %436 = vector.broadcast %cst_181 : f32 to vector<1x32xf32>
    %437 = arith.mulf %435, %436 : vector<1x32xf32>
    %438 = arith.addf %389, %437 : vector<1x32xf32>
    %cst_182 = arith.constant 0.899999976 : f32
    %439 = vector.broadcast %cst_182 : f32 to vector<1x32xf32>
    %440 = arith.mulf %383, %439 : vector<1x32xf32>
    %cst_183 = arith.constant 1.000000e-01 : f32
    %441 = vector.broadcast %cst_183 : f32 to vector<1x32xf32>
    %442 = arith.mulf %438, %441 : vector<1x32xf32>
    %443 = arith.addf %440, %442 : vector<1x32xf32>
    %cst_184 = arith.constant 0.000000e+00 : f32
    %444 = vector.broadcast %cst_184 : f32 to vector<1x32xf32>
    %445 = arith.maximumf %443, %444 : vector<1x32xf32>
    %446 = arith.index_cast %c6_i32 : i32 to index
    %c0_185 = arith.constant 0 : index
    %447 = vector.load %arg10[%446, %c0_185] : memref<8x32xf32, #tpu.memory_space<vmem>>, vector<1x32xf32>
    tpu.vector_store %arg10[%446, %c0_185], %445 {strides = array<i32>} : memref<8x32xf32, #tpu.memory_space<vmem>>, vector<1x32xf32>,
    %c7_i32 = arith.constant 7 : i32
    %448 = arith.index_cast %c7_i32 : i32 to index
    %c0_186 = arith.constant 0 : index
    %449 = vector.load %arg10[%448, %c0_186] : memref<8x32xf32, #tpu.memory_space<vmem>>, vector<1x32xf32>
    %cst_187 = arith.constant dense<0.000000e+00> : vector<1x32xf32>
    %450 = tpu.matmul %445, %0, %cst_187 {dimension_numbers = #tpu.dot_dimension_numbers<[1], [0], [0], [1], [0, 0, 1, 1], [], []>} : vector<1x32xf32>, vector<32x32xf32>, vector<1x32xf32> -> vector<1x32xf32>
    %451 = arith.addf %449, %450 : vector<1x32xf32>
    %cst_188 = arith.constant 0.000000e+00 : f32
    %452 = vector.broadcast %cst_188 : f32 to vector<1x8xf32>
    %453 = arith.subf %452, %396 : vector<1x8xf32>
    %cst_189 = arith.constant dense<0.000000e+00> : vector<1x8xf32>
    %454 = tpu.matmul %445, %429, %cst_189 {dimension_numbers = #tpu.dot_dimension_numbers<[1], [0], [0], [1], [0, 0, 1, 1], [], []>} : vector<1x32xf32>, vector<32x8xf32>, vector<1x8xf32> -> vector<1x8xf32>
    %455 = arith.addf %453, %454 : vector<1x8xf32>
    %cst_190 = arith.constant 1.250000e-02 : f32
    %456 = vector.broadcast %cst_190 : f32 to vector<1x8xf32>
    %457 = arith.mulf %456, %455 : vector<1x8xf32>
    %458 = arith.addf %396, %457 : vector<1x8xf32>
    %459 = vector.shape_cast %458 : vector<1x8xf32> to vector<1x1x8xf32>
    %cst_191 = arith.constant dense<0xFF800000> : vector<1xf32>
    %460 = vector.multi_reduction <maximumf>, %459, %cst_191 [1, 2] : vector<1x1x8xf32> to vector<1xf32>
    %461 = vector.shape_cast %460 : vector<1xf32> to vector<1x1x1xf32>
    %462 = vector.extract %461[0, 0, 0] : f32 from vector<1x1x1xf32>
    %463 = vector.broadcast %462 : f32 to vector<1x8xf32>
    %464 = arith.cmpf oge, %458, %463 : vector<1x8xf32>
    %cst_192 = arith.constant 1.000000e+00 : f32
    %cst_193 = arith.constant 0.000000e+00 : f32
    %465 = vector.broadcast %cst_192 : f32 to vector<1x8xf32>
    %466 = vector.broadcast %cst_193 : f32 to vector<1x8xf32>
    %467 = arith.select %464, %465, %466 : vector<1x8xi1>, vector<1x8xf32>
    %cst_194 = arith.constant 0.000000e+00 : f32
    %468 = vector.broadcast %cst_194 : f32 to vector<1x8xf32>
    %469 = arith.subf %468, %411 : vector<1x8xf32>
    %470 = arith.addf %469, %467 : vector<1x8xf32>
    %cst_195 = arith.constant 1.000000e-03 : f32
    %471 = vector.broadcast %cst_195 : f32 to vector<1x8xf32>
    %472 = arith.mulf %471, %470 : vector<1x8xf32>
    %473 = arith.addf %411, %472 : vector<1x8xf32>
    %474 = vector.shape_cast %473 : vector<1x8xf32> to vector<1x1x8xf32>
    %cst_196 = arith.constant dense<0xFF800000> : vector<1xf32>
    %475 = vector.multi_reduction <maximumf>, %474, %cst_196 [1, 2] : vector<1x1x8xf32> to vector<1xf32>
    %476 = vector.shape_cast %475 : vector<1xf32> to vector<1x1x1xf32>
    %477 = vector.extract %476[0, 0, 0] : f32 from vector<1x1x1xf32>
    %478 = vector.broadcast %477 : f32 to vector<1x8xf32>
    %479 = arith.cmpf oge, %473, %478 : vector<1x8xf32>
    %cst_197 = arith.constant 1.000000e+00 : f32
    %cst_198 = arith.constant 0.000000e+00 : f32
    %480 = vector.broadcast %cst_197 : f32 to vector<1x8xf32>
    %481 = vector.broadcast %cst_198 : f32 to vector<1x8xf32>
    %482 = arith.select %479, %480, %481 : vector<1x8xi1>, vector<1x8xf32>
    %cst_199 = arith.constant 5.000000e-01 : f32
    %483 = vector.broadcast %cst_199 : f32 to vector<1x8xf32>
    %484 = arith.subf %482, %483 : vector<1x8xf32>
    %485 = vector.broadcast %484 : vector<1x8xf32> to vector<32x8xf32>
    %486 = arith.mulf %1, %485 : vector<32x8xf32>
    %487 = arith.addf %429, %486 : vector<32x8xf32>
    %cst_200 = arith.constant 0.000000e+00 : f32
    %cst_201 = arith.constant 1.000000e+00 : f32
    %488 = vector.broadcast %cst_200 : f32 to vector<32x8xf32>
    %489 = arith.maximumf %488, %487 : vector<32x8xf32>
    %490 = vector.broadcast %cst_201 : f32 to vector<32x8xf32>
    %491 = arith.minimumf %490, %489 : vector<32x8xf32>
    %492 = arith.addf %434, %486 : vector<32x8xf32>
    %cst_202 = arith.constant -1.000000e+00 : f32
    %cst_203 = arith.constant 0.000000e+00 : f32
    %493 = vector.broadcast %cst_202 : f32 to vector<32x8xf32>
    %494 = arith.maximumf %493, %492 : vector<32x8xf32>
    %495 = vector.broadcast %cst_203 : f32 to vector<32x8xf32>
    %496 = arith.minimumf %495, %494 : vector<32x8xf32>
    %cst_204 = arith.constant dense<0.000000e+00> : vector<1x32xf32>
    %497 = tpu.matmul %467, %496, %cst_204 {dimension_numbers = #tpu.dot_dimension_numbers<[1], [1], [0], [0], [0, 0, 1, 0], [], []>} : vector<1x8xf32>, vector<32x8xf32>, vector<1x32xf32> -> vector<1x32xf32>
    %cst_205 = arith.constant 1.250000e-01 : f32
    %498 = vector.broadcast %cst_205 : f32 to vector<1x32xf32>
    %499 = arith.mulf %497, %498 : vector<1x32xf32>
    %500 = arith.addf %451, %499 : vector<1x32xf32>
    %cst_206 = arith.constant 0.899999976 : f32
    %501 = vector.broadcast %cst_206 : f32 to vector<1x32xf32>
    %502 = arith.mulf %445, %501 : vector<1x32xf32>
    %cst_207 = arith.constant 1.000000e-01 : f32
    %503 = vector.broadcast %cst_207 : f32 to vector<1x32xf32>
    %504 = arith.mulf %500, %503 : vector<1x32xf32>
    %505 = arith.addf %502, %504 : vector<1x32xf32>
    %cst_208 = arith.constant 0.000000e+00 : f32
    %506 = vector.broadcast %cst_208 : f32 to vector<1x32xf32>
    %507 = arith.maximumf %505, %506 : vector<1x32xf32>
    %508 = arith.index_cast %c7_i32 : i32 to index
    %c0_209 = arith.constant 0 : index
    %509 = vector.load %arg10[%508, %c0_209] : memref<8x32xf32, #tpu.memory_space<vmem>>, vector<1x32xf32>
    tpu.vector_store %arg10[%508, %c0_209], %507 {strides = array<i32>} : memref<8x32xf32, #tpu.memory_space<vmem>>, vector<1x32xf32>,
    %c8_i32 = arith.constant 8 : i32
    %c0_210 = arith.constant 0 : index
    %c0_211 = arith.constant 0 : index
    %510 = vector.load %arg10[%c0_210, %c0_211] : memref<8x32xf32, #tpu.memory_space<vmem>>, vector<8x32xf32>
    %c0_212 = arith.constant 0 : index
    %c0_213 = arith.constant 0 : index
    %511 = vector.load %arg4[%c0_212, %c0_213] : memref<32x4xf32, #tpu.memory_space<vmem>>, vector<32x4xf32>
    %cst_214 = arith.constant dense<0.000000e+00> : vector<8x4xf32>
    %512 = tpu.matmul %510, %511, %cst_214 {dimension_numbers = #tpu.dot_dimension_numbers<[1], [0], [0], [1], [0, 0, 1, 1], [], []>} : vector<8x32xf32>, vector<32x4xf32>, vector<8x4xf32> -> vector<8x4xf32>
    %c0_215 = arith.constant 0 : index
    %c0_216 = arith.constant 0 : index
    %513 = vector.load %arg5[%c0_215, %c0_216] : memref<1x4xf32, #tpu.memory_space<vmem>>, vector<1x4xf32>
    %514 = vector.broadcast %513 : vector<1x4xf32> to vector<8x4xf32>
    %515 = arith.addf %512, %514 : vector<8x4xf32>
    %c0_217 = arith.constant 0 : index
    %c0_218 = arith.constant 0 : index
    %516 = vector.load %arg9[%c0_217, %c0_218] : memref<8x4xf32, #tpu.memory_space<vmem>>, vector<8x4xf32>
    tpu.vector_store %arg9[%c0_217, %c0_218], %515 {strides = array<i32>} : memref<8x4xf32, #tpu.memory_space<vmem>>, vector<8x4xf32>,
    return
  }
}

</mosaic_0001>

<llo_original>
// kernel: tpu_custom_call.1
$region0: #{tpu_custom_call.1}
  #allocation0 [shape = 'u32[]', space=smem, size = 0x4, offset = 0x4, fixed_abs, tag = 'smem constant byte address 0x4 - core index']
  #allocation1 [shape = 'u32[72,128]{1,0:T(1,128)}', space=vmem, size = 0x9000, scoped, tag = 'internal scratch']
  %s0 = inlined_call_operand.vmem [shape: f32[8,8], index: 0, kind: input, shape index: {}]
  %s1 = inlined_call_operand.vmem [shape: f32[8,32], index: 1, kind: input, shape index: {}]
  %s2 = inlined_call_operand.vmem [shape: f32[1,32], index: 2, kind: input, shape index: {}]
  %s3 = inlined_call_operand.vmem [shape: f32[32,32], index: 3, kind: input, shape index: {}]
  %s4 = inlined_call_operand.vmem [shape: f32[32,4], index: 4, kind: input, shape index: {}]
  %s5 = inlined_call_operand.vmem [shape: f32[1,4], index: 5, kind: input, shape index: {}]
  %s6 = inlined_call_operand.vmem [shape: f32[32,8], index: 6, kind: input, shape index: {}]
  %s7 = inlined_call_operand.vmem [shape: f32[32,8], index: 7, kind: input, shape index: {}]
  %s8 = inlined_call_operand.vmem [shape: f32[32,8], index: 8, kind: input, shape index: {}]
  %s9 = inlined_call_operand.vmem [shape: f32[8,4], index: 9, kind: output, shape index: {0}]
  %s10 = inlined_call_operand.hbm [shape: f32[8,32], index: 10, kind: output, shape index: {1}]
  %11 = xla_tuple %s9, %s10
  %s12 = sld [smem:[#allocation0]]
  $region54: #{tpu_custom_call.1} parent=0
    _
  %s14 = ssub.s32 1, %s12
  %s15 = scalar_select 0, %s14, %s12
  $region1: #{tpu_custom_call.1} parent=0
    #allocation2 [shape = 'u8[4096]{0}', space=vmem, size = 0x1000, scoped, tag = 'output window, operand 1, single buffered']
    #allocation3 [shape = 's32[1]{0}', space=sflag, size = 0x4, scoped, tag = 'scoped memory for tpu_custom_call.1']
    %16 = vsyncpa [#allocation3], 0
    // Predicated region
    $region2: #{tpu_custom_call.1} parent=1 // pred_check
      _
    $region3: #{tpu_custom_call.1} parent=1 // pred_check_branch
      %18 = sbr.rel (0) target = $region5
    $region4: #{tpu_custom_call.1} parent=1 // pred_region
      _
    $region5: #{tpu_custom_call.1} parent=1 // pred_fallthru
      _
    // Predicated region
    $region6: #{tpu_custom_call.1} parent=1 // pred_check
      _
    $region7: #{tpu_custom_call.1} parent=1 // pred_check_branch
      %20 = sbr.rel (0) target = $region9
    $region8: #{tpu_custom_call.1} parent=1 // pred_region
      _
    $region9: #{tpu_custom_call.1} parent=1 // pred_fallthru
      _
    // Predicated region
    $region10: #{tpu_custom_call.1} parent=1 // pred_check
      _
    $region11: #{tpu_custom_call.1} parent=1 // pred_check_branch
      %22 = sbr.rel (0) target = $region13
    $region12: #{tpu_custom_call.1} parent=1 // pred_region
      _
    $region13: #{tpu_custom_call.1} parent=1 // pred_fallthru
      _
    // Predicated region
    $region14: #{tpu_custom_call.1} parent=1 // pred_check
      _
    $region15: #{tpu_custom_call.1} parent=1 // pred_check_branch
      %24 = sbr.rel (0) target = $region17
    $region16: #{tpu_custom_call.1} parent=1 // pred_region
      _
    $region17: #{tpu_custom_call.1} parent=1 // pred_fallthru
      _
    // Predicated region
    $region18: #{tpu_custom_call.1} parent=1 // pred_check
      _
    $region19: #{tpu_custom_call.1} parent=1 // pred_check_branch
      %26 = sbr.rel (0) target = $region21
    $region20: #{tpu_custom_call.1} parent=1 // pred_region
      _
    $region21: #{tpu_custom_call.1} parent=1 // pred_fallthru
      _
    // Predicated region
    $region22: #{tpu_custom_call.1} parent=1 // pred_check
      _
    $region23: #{tpu_custom_call.1} parent=1 // pred_check_branch
      %28 = sbr.rel (0) target = $region25
    $region24: #{tpu_custom_call.1} parent=1 // pred_region
      _
    $region25: #{tpu_custom_call.1} parent=1 // pred_fallthru
      _
    // Predicated region
    $region26: #{tpu_custom_call.1} parent=1 // pred_check
      _
    $region27: #{tpu_custom_call.1} parent=1 // pred_check_branch
      %30 = sbr.rel (0) target = $region29
    $region28: #{tpu_custom_call.1} parent=1 // pred_region
      _
    $region29: #{tpu_custom_call.1} parent=1 // pred_fallthru
      _
    // Predicated region
    $region30: #{tpu_custom_call.1} parent=1 // pred_check
      _
    $region31: #{tpu_custom_call.1} parent=1 // pred_check_branch
      %32 = sbr.rel (0) target = $region33
    $region32: #{tpu_custom_call.1} parent=1 // pred_region
      _
    $region33: #{tpu_custom_call.1} parent=1 // pred_fallthru
      _
    // Predicated region
    $region34: #{tpu_custom_call.1} parent=1 // pred_check
      _
    $region35: #{tpu_custom_call.1} parent=1 // pred_check_branch
      %34 = sbr.rel (0) target = $region37
    $region36: #{tpu_custom_call.1} parent=1 // pred_region
      _
    $region37: #{tpu_custom_call.1} parent=1 // pred_fallthru
      _
    %v35 = vld [vmem:[%s3] sm:$0xff]
    %v36 = vld [vmem:[%s3 + $0x8] sm:$0xff]
    %v37 = vld [vmem:[%s3 + $0x10] sm:$0xff]
    %v38 = vld [vmem:[%s3 + $0x18] sm:$0xff]
    %v39 = vld [vmem:[%s6] sm:$0xff]
    %v40 = vld [vmem:[%s6 + $0x8] sm:$0xff]
    %v41 = vld [vmem:[%s6 + $0x10] sm:$0xff]
    %v42 = vld [vmem:[%s6 + $0x18] sm:$0xff]
    %v43 = vld [vmem:[%s0] sm:$0xff]
    %v44 = vld [vmem:[%s1] sm:$0xff]
    %v45 = vld [vmem:[%s2] sm:$0x1]
    %v47 = vperm.slane %v45, 0
    %vm49 = vcmask 64512
    %v51 = vsel %vm49, %v43, 0
    %53 = vmatpush.msra.mxu0 0.0
    %54 = vmatpush.msra.mxu0 0.0
    %55 = vmatpush.msra.mxu0 0.0
    %56 = vmatpush.msra.mxu0 0.0
    %57 = vmatpush.msra.mxu0 0.0
    %58 = vmatpush.msra.mxu0 0.0
    %59 = vmatpush.msra.mxu0 0.0
    %60 = vmatpush.msra.mxu0 0.0
    %61 = vmatpush.msra.mxu0 0.0
    %62 = vmatpush.msra.mxu0 0.0
    %63 = vmatpush.msra.mxu0 0.0
    %64 = vmatpush.msra.mxu0 0.0
    %65 = vmatpush.msra.mxu0 0.0
    %66 = vmatpush.msra.mxu0 0.0
    %67 = vmatpush.msra.mxu0 0.0
    %68 = vmatpush.msra.mxu0 %v44
    %69 = vmatmul.f32.gmra.mxu0 %v51
    %v70 = vpop.f32.mrf.mxu0
    %v71 = vadd.f32 %v47, %v70
    %72 = vdwg.mxu0
    %vm73 = vcmask 261120
    %74 = vst.msk [vmem:[#allocation2] sm:$0xff] %vm73, %v71
    %v75 = vld [vmem:[%s7] sm:$0xff]
    %v76 = vld [vmem:[%s7 + $0x8] sm:$0xff]
    %v77 = vld [vmem:[%s7 + $0x10] sm:$0xff]
    %v78 = vld [vmem:[%s7 + $0x18] sm:$0xff]
    %v79 = vld [vmem:[%s8] sm:$0xff]
    %v80 = vld [vmem:[%s8 + $0x8] sm:$0xff]
    %v81 = vld [vmem:[%s8 + $0x10] sm:$0xff]
    %v82 = vld [vmem:[%s8 + $0x18] sm:$0xff]
    %v83 = vld [vmem:[#allocation2] sm:$0x1]
    %v85 = vsel %vm73, 0.0, 0
    %87 = vmatpush.msra.mxu0 0.0
    %88 = vmatpush.msra.mxu0 0.0
    %89 = vmatpush.msra.mxu0 0.0
    %90 = vmatpush.msra.mxu0 0.0
    %91 = vmatpush.msra.mxu0 0.0
    %92 = vmatpush.msra.mxu0 0.0
    %93 = vmatpush.msra.mxu0 0.0
    %94 = vmatpush.msra.mxu0 0.0
    %95 = vmatpush.msra.mxu0 0.0
    %96 = vmatpush.msra.mxu0 0.0
    %97 = vmatpush.msra.mxu0 0.0
    %98 = vmatpush.msra.mxu0 0.0
    %99 = vmatpush.msra.mxu0 %v38
    %100 = vmatpush.msra.mxu0 %v37
    %101 = vmatpush.msra.mxu0 %v36
    %102 = vmatpush.msra.mxu0 %v35
    %103 = vmatmul.f32.gmra.mxu0 %v85
    %v104 = vpop.f32.mrf.mxu0
    %v105 = vadd.f32 0.0, %v104
    %106 = vdwg.mxu0
    %v107 = vadd.f32 %v83, %v105
    %108 = vmatpush.msra.mxu0 0.0
    %109 = vmatpush.msra.mxu0 0.0
    %110 = vmatpush.msra.mxu0 0.0
    %111 = vmatpush.msra.mxu0 0.0
    %112 = vmatpush.msra.mxu0 0.0
    %113 = vmatpush.msra.mxu0 0.0
    %114 = vmatpush.msra.mxu0 0.0
    %115 = vmatpush.msra.mxu0 0.0
    %116 = vmatpush.msra.mxu0 0.0
    %117 = vmatpush.msra.mxu0 0.0
    %118 = vmatpush.msra.mxu0 0.0
    %119 = vmatpush.msra.mxu0 0.0
    %120 = vmatpush.msra.mxu0 %v78
    %121 = vmatpush.msra.mxu0 %v77
    %122 = vmatpush.msra.mxu0 %v76
    %123 = vmatpush.msra.mxu0 %v75
    %124 = vmatmul.f32.gmra.mxu0 %v85
    %v125 = vpop.f32.mrf.mxu0
    %v126 = vadd.f32 0.0, %v125
    %127 = vdwg.mxu0
    %v128 = vmul.f32 %v126, 0.0125
    %v129 = vadd.f32 %v128, 0.0
    %vm130 = vcmask 57344
    %v131 = vsel %vm130, %v129, -inf
    %132 = vmax.xlane.f32.xlu0 %v131
    %v133 = vpop.xlane.xlu0 %132
    %v134 = vrot.slane %v133, 4
    %v135 = vmax.f32 %v133, %v134
    %v136 = vrot.slane %v135, 2
    %v137 = vmax.f32 %v135, %v136
    %v138 = vrot.slane %v137, 1
    %v139 = vmax.f32 %v137, %v138
    %s140 = vtos %v139
    %v141 = vstv %s140
    %vm142 = vcmp.ge.f32.partialorder %v129, %v141
    %v143 = vsel %vm142, 1.0, 0.0
    %v144 = vadd.f32 %v143, 0.0
    %v145 = vmul.f32 %v144, 0.001
    %v146 = vadd.f32 %v145, 0.0
    %v147 = vsel %vm130, %v146, -inf
    %148 = vmax.xlane.f32.xlu0 %v147
    %v149 = vpop.xlane.xlu0 %148
    %v150 = vrot.slane %v149, 4
    %v151 = vmax.f32 %v149, %v150
    %v152 = vrot.slane %v151, 2
    %v153 = vmax.f32 %v151, %v152
    %v154 = vrot.slane %v153, 1
    %v155 = vmax.f32 %v153, %v154
    %s156 = vtos %v155
    %v157 = vstv %s156
    %vm158 = vcmp.ge.f32.partialorder %v146, %v157
    %v159 = vsel %vm158, 1.0, 0.0
    %v160 = vsub.f32 %v159, 0.5
    %v161 = vperm.slane %v160, 0
    %v162 = vmul.f32 %v39, %v161
    %v163 = vmul.f32 %v40, %v161
    %v164 = vmul.f32 %v41, %v161
    %v165 = vmul.f32 %v42, %v161
    %v166 = vadd.f32 %v75, %v162
    %v167 = vadd.f32 %v76, %v163
    %v168 = vadd.f32 %v77, %v164
    %v169 = vadd.f32 %v78, %v165
    %v170 = vmax.f32 %v166, 0.0
    %v171 = vmax.f32 %v167, 0.0
    %v172 = vmax.f32 %v168, 0.0
    %v173 = vmax.f32 %v169, 0.0
    %v174 = vmin.f32 %v170, 1.0
    %v175 = vmin.f32 %v171, 1.0
    %v176 = vmin.f32 %v172, 1.0
    %v177 = vmin.f32 %v173, 1.0
    %v178 = vadd.f32 %v79, %v162
    %v179 = vadd.f32 %v80, %v163
    %v180 = vadd.f32 %v81, %v164
    %v181 = vadd.f32 %v82, %v165
    %v182 = vmax.f32 %v178, -1.0
    %v183 = vmax.f32 %v179, -1.0
    %v184 = vmax.f32 %v180, -1.0
    %v185 = vmax.f32 %v181, -1.0
    %v186 = vmin.f32 %v182, 0.0
    %v187 = vmin.f32 %v183, 0.0
    %v188 = vmin.f32 %v184, 0.0
    %v189 = vmin.f32 %v185, 0.0
    %v191 = vsel %vm49, %v143, 0
    %v194 = vsel %vm49, %v186, 0
    %v197 = vsel %vm49, %v187, 0
    %v200 = vsel %vm49, %v188, 0
    %v203 = vsel %vm49, %v189, 0
    %205 = vmatpush.xpose.msra.mxu0 0.0
    %206 = vmatpush.xpose.msra.mxu0 0.0
    %207 = vmatpush.xpose.msra.mxu0 0.0
    %208 = vmatpush.xpose.msra.mxu0 0.0
    %209 = vmatpush.xpose.msra.mxu0 0.0
    %210 = vmatpush.xpose.msra.mxu0 0.0
    %211 = vmatpush.xpose.msra.mxu0 0.0
    %212 = vmatpush.xpose.msra.mxu0 0.0
    %213 = vmatpush.xpose.msra.mxu0 0.0
    %214 = vmatpush.xpose.msra.mxu0 0.0
    %215 = vmatpush.xpose.msra.mxu0 0.0
    %216 = vmatpush.xpose.msra.mxu0 0.0
    %217 = vmatpush.xpose.msra.mxu0 %v203
    %218 = vmatpush.xpose.msra.mxu0 %v200
    %219 = vmatpush.xpose.msra.mxu0 %v197
    %220 = vmatpush.xpose.msra.mxu0 %v194
    %221 = vmatmul.f32.gmra.mxu0 %v191
    %v222 = vpop.f32.mrf.mxu0
    %v223 = vadd.f32 0.0, %v222
    %224 = vdwg.mxu0
    %v225 = vmul.f32 %v223, 0.125
    %v226 = vadd.f32 %v107, %v225
    %v227 = vmul.f32 %v226, 0.1
    %v228 = vadd.f32 %v227, 0.0
    %v229 = vmax.f32 %v228, 0.0
    %vm230 = vcmask 253952
    %231 = vst.msk [vmem:[#allocation2] sm:$0x1] %vm230, %v229
    %v232 = vld [vmem:[#allocation2 + $0x1] sm:$0x1]
    %v234 = vsel %vm73, %v229, 0
    %236 = vmatpush.msra.mxu0 0.0
    %237 = vmatpush.msra.mxu0 0.0
    %238 = vmatpush.msra.mxu0 0.0
    %239 = vmatpush.msra.mxu0 0.0
    %240 = vmatpush.msra.mxu0 0.0
    %241 = vmatpush.msra.mxu0 0.0
    %242 = vmatpush.msra.mxu0 0.0
    %243 = vmatpush.msra.mxu0 0.0
    %244 = vmatpush.msra.mxu0 0.0
    %245 = vmatpush.msra.mxu0 0.0
    %246 = vmatpush.msra.mxu0 0.0
    %247 = vmatpush.msra.mxu0 0.0
    %248 = vmatpush.msra.mxu0 %v38
    %249 = vmatpush.msra.mxu0 %v37
    %250 = vmatpush.msra.mxu0 %v36
    %251 = vmatpush.msra.mxu0 %v35
    %252 = vmatmul.f32.gmra.mxu0 %v234
    %v253 = vpop.f32.mrf.mxu0
    %v254 = vadd.f32 0.0, %v253
    %255 = vdwg.mxu0
    %v256 = vadd.f32 %v232, %v254
    %v257 = vsub.f32 0.0, %v129
    %258 = vmatpush.msra.mxu0 0.0
    %259 = vmatpush.msra.mxu0 0.0
    %260 = vmatpush.msra.mxu0 0.0
    %261 = vmatpush.msra.mxu0 0.0
    %262 = vmatpush.msra.mxu0 0.0
    %263 = vmatpush.msra.mxu0 0.0
    %264 = vmatpush.msra.mxu0 0.0
    %265 = vmatpush.msra.mxu0 0.0
    %266 = vmatpush.msra.mxu0 0.0
    %267 = vmatpush.msra.mxu0 0.0
    %268 = vmatpush.msra.mxu0 0.0
    %269 = vmatpush.msra.mxu0 0.0
    %270 = vmatpush.msra.mxu0 %v177
    %271 = vmatpush.msra.mxu0 %v176
    %272 = vmatpush.msra.mxu0 %v175
    %273 = vmatpush.msra.mxu0 %v174
    %274 = vmatmul.f32.gmra.mxu0 %v234
    %v275 = vpop.f32.mrf.mxu0
    %v276 = vadd.f32 0.0, %v275
    %277 = vdwg.mxu0
    %v278 = vadd.f32 %v257, %v276
    %v279 = vmul.f32 %v278, 0.0125
    %v280 = vadd.f32 %v129, %v279
    %v281 = vsel %vm130, %v280, -inf
    %282 = vmax.xlane.f32.xlu0 %v281
    %v283 = vpop.xlane.xlu0 %282
    %v284 = vrot.slane %v283, 4
    %v285 = vmax.f32 %v283, %v284
    %v286 = vrot.slane %v285, 2
    %v287 = vmax.f32 %v285, %v286
    %v288 = vrot.slane %v287, 1
    %v289 = vmax.f32 %v287, %v288
    %s290 = vtos %v289
    %v291 = vstv %s290
    %vm292 = vcmp.ge.f32.partialorder %v280, %v291
    %v293 = vsel %vm292, 1.0, 0.0
    %v294 = vsub.f32 0.0, %v146
    %v295 = vadd.f32 %v294, %v293
    %v296 = vmul.f32 %v295, 0.001
    %v297 = vadd.f32 %v146, %v296
    %v298 = vsel %vm130, %v297, -inf
    %299 = vmax.xlane.f32.xlu0 %v298
    %v300 = vpop.xlane.xlu0 %299
    %v301 = vrot.slane %v300, 4
    %v302 = vmax.f32 %v300, %v301
    %v303 = vrot.slane %v302, 2
    %v304 = vmax.f32 %v302, %v303
    %v305 = vrot.slane %v304, 1
    %v306 = vmax.f32 %v304, %v305
    %s307 = vtos %v306
    %v308 = vstv %s307
    %vm309 = vcmp.ge.f32.partialorder %v297, %v308
    %v310 = vsel %vm309, 1.0, 0.0
    %v311 = vsub.f32 %v310, 0.5
    %v312 = vperm.slane %v311, 0
    %v313 = vmul.f32 %v39, %v312
    %v314 = vmul.f32 %v40, %v312
    %v315 = vmul.f32 %v41, %v312
    %v316 = vmul.f32 %v42, %v312
    %v317 = vadd.f32 %v174, %v313
    %v318 = vadd.f32 %v175, %v314
    %v319 = vadd.f32 %v176, %v315
    %v320 = vadd.f32 %v177, %v316
    %v321 = vmax.f32 %v317, 0.0
    %v322 = vmax.f32 %v318, 0.0
    %v323 = vmax.f32 %v319, 0.0
    %v324 = vmax.f32 %v320, 0.0
    %v325 = vmin.f32 %v321, 1.0
    %v326 = vmin.f32 %v322, 1.0
    %v327 = vmin.f32 %v323, 1.0
    %v328 = vmin.f32 %v324, 1.0
    %v329 = vadd.f32 %v186, %v313
    %v330 = vadd.f32 %v187, %v314
    %v331 = vadd.f32 %v188, %v315
    %v332 = vadd.f32 %v189, %v316
    %v333 = vmax.f32 %v329, -1.0
    %v334 = vmax.f32 %v330, -1.0
    %v335 = vmax.f32 %v331, -1.0
    %v336 = vmax.f32 %v332, -1.0
    %v337 = vmin.f32 %v333, 0.0
    %v338 = vmin.f32 %v334, 0.0
    %v339 = vmin.f32 %v335, 0.0
    %v340 = vmin.f32 %v336, 0.0
    %v342 = vsel %vm49, %v293, 0
    %v345 = vsel %vm49, %v337, 0
    %v348 = vsel %vm49, %v338, 0
    %v351 = vsel %vm49, %v339, 0
    %v354 = vsel %vm49, %v340, 0
    %356 = vmatpush.xpose.msra.mxu0 0.0
    %357 = vmatpush.xpose.msra.mxu0 0.0
    %358 = vmatpush.xpose.msra.mxu0 0.0
    %359 = vmatpush.xpose.msra.mxu0 0.0
    %360 = vmatpush.xpose.msra.mxu0 0.0
    %361 = vmatpush.xpose.msra.mxu0 0.0
    %362 = vmatpush.xpose.msra.mxu0 0.0
    %363 = vmatpush.xpose.msra.mxu0 0.0
    %364 = vmatpush.xpose.msra.mxu0 0.0
    %365 = vmatpush.xpose.msra.mxu0 0.0
    %366 = vmatpush.xpose.msra.mxu0 0.0
    %367 = vmatpush.xpose.msra.mxu0 0.0
    %368 = vmatpush.xpose.msra.mxu0 %v354
    %369 = vmatpush.xpose.msra.mxu0 %v351
    %370 = vmatpush.xpose.msra.mxu0 %v348
    %371 = vmatpush.xpose.msra.mxu0 %v345
    %372 = vmatmul.f32.gmra.mxu0 %v342
    %v373 = vpop.f32.mrf.mxu0
    %v374 = vadd.f32 0.0, %v373
    %375 = vdwg.mxu0
    %v376 = vmul.f32 %v374, 0.125
    %v377 = vadd.f32 %v256, %v376
    %v378 = vmul.f32 %v229, 0.9
    %v379 = vmul.f32 %v377, 0.1
    %v380 = vadd.f32 %v378, %v379
    %v381 = vmax.f32 %v380, 0.0
    %382 = vst.msk [vmem:[#allocation2 + $0x1] sm:$0x1] %vm230, %v381
    %v383 = vld [vmem:[#allocation2 + $0x2] sm:$0x1]
    %v385 = vsel %vm73, %v381, 0
    %387 = vmatpush.msra.mxu0 0.0
    %388 = vmatpush.msra.mxu0 0.0
    %389 = vmatpush.msra.mxu0 0.0
    %390 = vmatpush.msra.mxu0 0.0
    %391 = vmatpush.msra.mxu0 0.0
    %392 = vmatpush.msra.mxu0 0.0
    %393 = vmatpush.msra.mxu0 0.0
    %394 = vmatpush.msra.mxu0 0.0
    %395 = vmatpush.msra.mxu0 0.0
    %396 = vmatpush.msra.mxu0 0.0
    %397 = vmatpush.msra.mxu0 0.0
    %398 = vmatpush.msra.mxu0 0.0
    %399 = vmatpush.msra.mxu0 %v38
    %400 = vmatpush.msra.mxu0 %v37
    %401 = vmatpush.msra.mxu0 %v36
    %402 = vmatpush.msra.mxu0 %v35
    %403 = vmatmul.f32.gmra.mxu0 %v385
    %v404 = vpop.f32.mrf.mxu0
    %v405 = vadd.f32 0.0, %v404
    %406 = vdwg.mxu0
    %v407 = vadd.f32 %v383, %v405
    %v408 = vsub.f32 0.0, %v280
    %409 = vmatpush.msra.mxu0 0.0
    %410 = vmatpush.msra.mxu0 0.0
    %411 = vmatpush.msra.mxu0 0.0
    %412 = vmatpush.msra.mxu0 0.0
    %413 = vmatpush.msra.mxu0 0.0
    %414 = vmatpush.msra.mxu0 0.0
    %415 = vmatpush.msra.mxu0 0.0
    %416 = vmatpush.msra.mxu0 0.0
    %417 = vmatpush.msra.mxu0 0.0
    %418 = vmatpush.msra.mxu0 0.0
    %419 = vmatpush.msra.mxu0 0.0
    %420 = vmatpush.msra.mxu0 0.0
    %421 = vmatpush.msra.mxu0 %v328
    %422 = vmatpush.msra.mxu0 %v327
    %423 = vmatpush.msra.mxu0 %v326
    %424 = vmatpush.msra.mxu0 %v325
    %425 = vmatmul.f32.gmra.mxu0 %v385
    %v426 = vpop.f32.mrf.mxu0
    %v427 = vadd.f32 0.0, %v426
    %428 = vdwg.mxu0
    %v429 = vadd.f32 %v408, %v427
    %v430 = vmul.f32 %v429, 0.0125
    %v431 = vadd.f32 %v280, %v430
    %v432 = vsel %vm130, %v431, -inf
    %433 = vmax.xlane.f32.xlu0 %v432
    %v434 = vpop.xlane.xlu0 %433
    %v435 = vrot.slane %v434, 4
    %v436 = vmax.f32 %v434, %v435
    %v437 = vrot.slane %v436, 2
    %v438 = vmax.f32 %v436, %v437
    %v439 = vrot.slane %v438, 1
    %v440 = vmax.f32 %v438, %v439
    %s441 = vtos %v440
    %v442 = vstv %s441
    %vm443 = vcmp.ge.f32.partialorder %v431, %v442
    %v444 = vsel %vm443, 1.0, 0.0
    %v445 = vsub.f32 0.0, %v297
    %v446 = vadd.f32 %v445, %v444
    %v447 = vmul.f32 %v446, 0.001
    %v448 = vadd.f32 %v297, %v447
    %v449 = vsel %vm130, %v448, -inf
    %450 = vmax.xlane.f32.xlu0 %v449
    %v451 = vpop.xlane.xlu0 %450
    %v452 = vrot.slane %v451, 4
    %v453 = vmax.f32 %v451, %v452
    %v454 = vrot.slane %v453, 2
    %v455 = vmax.f32 %v453, %v454
    %v456 = vrot.slane %v455, 1
    %v457 = vmax.f32 %v455, %v456
    %s458 = vtos %v457
    %v459 = vstv %s458
    %vm460 = vcmp.ge.f32.partialorder %v448, %v459
    %v461 = vsel %vm460, 1.0, 0.0
    %v462 = vsub.f32 %v461, 0.5
    %v463 = vperm.slane %v462, 0
    %v464 = vmul.f32 %v39, %v463
    %v465 = vmul.f32 %v40, %v463
    %v466 = vmul.f32 %v41, %v463
    %v467 = vmul.f32 %v42, %v463
    %v468 = vadd.f32 %v325, %v464
    %v469 = vadd.f32 %v326, %v465
    %v470 = vadd.f32 %v327, %v466
    %v471 = vadd.f32 %v328, %v467
    %v472 = vmax.f32 %v468, 0.0
    %v473 = vmax.f32 %v469, 0.0
    %v474 = vmax.f32 %v470, 0.0
    %v475 = vmax.f32 %v471, 0.0
    %v476 = vmin.f32 %v472, 1.0
    %v477 = vmin.f32 %v473, 1.0
    %v478 = vmin.f32 %v474, 1.0
    %v479 = vmin.f32 %v475, 1.0
    %v480 = vadd.f32 %v337, %v464
    %v481 = vadd.f32 %v338, %v465
    %v482 = vadd.f32 %v339, %v466
    %v483 = vadd.f32 %v340, %v467
    %v484 = vmax.f32 %v480, -1.0
    %v485 = vmax.f32 %v481, -1.0
    %v486 = vmax.f32 %v482, -1.0
    %v487 = vmax.f32 %v483, -1.0
    %v488 = vmin.f32 %v484, 0.0
    %v489 = vmin.f32 %v485, 0.0
    %v490 = vmin.f32 %v486, 0.0
    %v491 = vmin.f32 %v487, 0.0
    %v493 = vsel %vm49, %v444, 0
    %v496 = vsel %vm49, %v488, 0
    %v499 = vsel %vm49, %v489, 0
    %v502 = vsel %vm49, %v490, 0
    %v505 = vsel %vm49, %v491, 0
    %507 = vmatpush.xpose.msra.mxu0 0.0
    %508 = vmatpush.xpose.msra.mxu0 0.0
    %509 = vmatpush.xpose.msra.mxu0 0.0
    %510 = vmatpush.xpose.msra.mxu0 0.0
    %511 = vmatpush.xpose.msra.mxu0 0.0
    %512 = vmatpush.xpose.msra.mxu0 0.0
    %513 = vmatpush.xpose.msra.mxu0 0.0
    %514 = vmatpush.xpose.msra.mxu0 0.0
    %515 = vmatpush.xpose.msra.mxu0 0.0
    %516 = vmatpush.xpose.msra.mxu0 0.0
    %517 = vmatpush.xpose.msra.mxu0 0.0
    %518 = vmatpush.xpose.msra.mxu0 0.0
    %519 = vmatpush.xpose.msra.mxu0 %v505
    %520 = vmatpush.xpose.msra.mxu0 %v502
    %521 = vmatpush.xpose.msra.mxu0 %v499
    %522 = vmatpush.xpose.msra.mxu0 %v496
    %523 = vmatmul.f32.gmra.mxu0 %v493
    %v524 = vpop.f32.mrf.mxu0
    %v525 = vadd.f32 0.0, %v524
    %526 = vdwg.mxu0
    %v527 = vmul.f32 %v525, 0.125
    %v528 = vadd.f32 %v407, %v527
    %v529 = vmul.f32 %v381, 0.9
    %v530 = vmul.f32 %v528, 0.1
    %v531 = vadd.f32 %v529, %v530
    %v532 = vmax.f32 %v531, 0.0
    %533 = vst.msk [vmem:[#allocation2 + $0x2] sm:$0x1] %vm230, %v532
    %v534 = vld [vmem:[#allocation2 + $0x3] sm:$0x1]
    %v536 = vsel %vm73, %v532, 0
    %538 = vmatpush.msra.mxu0 0.0
    %539 = vmatpush.msra.mxu0 0.0
    %540 = vmatpush.msra.mxu0 0.0
    %541 = vmatpush.msra.mxu0 0.0
    %542 = vmatpush.msra.mxu0 0.0
    %543 = vmatpush.msra.mxu0 0.0
    %544 = vmatpush.msra.mxu0 0.0
    %545 = vmatpush.msra.mxu0 0.0
    %546 = vmatpush.msra.mxu0 0.0
    %547 = vmatpush.msra.mxu0 0.0
    %548 = vmatpush.msra.mxu0 0.0
    %549 = vmatpush.msra.mxu0 0.0
    %550 = vmatpush.msra.mxu0 %v38
    %551 = vmatpush.msra.mxu0 %v37
    %552 = vmatpush.msra.mxu0 %v36
    %553 = vmatpush.msra.mxu0 %v35
    %554 = vmatmul.f32.gmra.mxu0 %v536
    %v555 = vpop.f32.mrf.mxu0
    %v556 = vadd.f32 0.0, %v555
    %557 = vdwg.mxu0
    %v558 = vadd.f32 %v534, %v556
    %v559 = vsub.f32 0.0, %v431
    %560 = vmatpush.msra.mxu0 0.0
    %561 = vmatpush.msra.mxu0 0.0
    %562 = vmatpush.msra.mxu0 0.0
    %563 = vmatpush.msra.mxu0 0.0
    %564 = vmatpush.msra.mxu0 0.0
    %565 = vmatpush.msra.mxu0 0.0
    %566 = vmatpush.msra.mxu0 0.0
    %567 = vmatpush.msra.mxu0 0.0
    %568 = vmatpush.msra.mxu0 0.0
    %569 = vmatpush.msra.mxu0 0.0
    %570 = vmatpush.msra.mxu0 0.0
    %571 = vmatpush.msra.mxu0 0.0
    %572 = vmatpush.msra.mxu0 %v479
    %573 = vmatpush.msra.mxu0 %v478
    %574 = vmatpush.msra.mxu0 %v477
    %575 = vmatpush.msra.mxu0 %v476
    %576 = vmatmul.f32.gmra.mxu0 %v536
    %v577 = vpop.f32.mrf.mxu0
    %v578 = vadd.f32 0.0, %v577
    %579 = vdwg.mxu0
    %v580 = vadd.f32 %v559, %v578
    %v581 = vmul.f32 %v580, 0.0125
    %v582 = vadd.f32 %v431, %v581
    %v583 = vsel %vm130, %v582, -inf
    %584 = vmax.xlane.f32.xlu0 %v583
    %v585 = vpop.xlane.xlu0 %584
    %v586 = vrot.slane %v585, 4
    %v587 = vmax.f32 %v585, %v586
    %v588 = vrot.slane %v587, 2
    %v589 = vmax.f32 %v587, %v588
    %v590 = vrot.slane %v589, 1
    %v591 = vmax.f32 %v589, %v590
    %s592 = vtos %v591
    %v593 = vstv %s592
    %vm594 = vcmp.ge.f32.partialorder %v582, %v593
    %v595 = vsel %vm594, 1.0, 0.0
    %v596 = vsub.f32 0.0, %v448
    %v597 = vadd.f32 %v596, %v595
    %v598 = vmul.f32 %v597, 0.001
    %v599 = vadd.f32 %v448, %v598
    %v600 = vsel %vm130, %v599, -inf
    %601 = vmax.xlane.f32.xlu0 %v600
    %v602 = vpop.xlane.xlu0 %601
    %v603 = vrot.slane %v602, 4
    %v604 = vmax.f32 %v602, %v603
    %v605 = vrot.slane %v604, 2
    %v606 = vmax.f32 %v604, %v605
    %v607 = vrot.slane %v606, 1
    %v608 = vmax.f32 %v606, %v607
    %s609 = vtos %v608
    %v610 = vstv %s609
    %vm611 = vcmp.ge.f32.partialorder %v599, %v610
    %v612 = vsel %vm611, 1.0, 0.0
    %v613 = vsub.f32 %v612, 0.5
    %v614 = vperm.slane %v613, 0
    %v615 = vmul.f32 %v39, %v614
    %v616 = vmul.f32 %v40, %v614
    %v617 = vmul.f32 %v41, %v614
    %v618 = vmul.f32 %v42, %v614
    %v619 = vadd.f32 %v476, %v615
    %v620 = vadd.f32 %v477, %v616
    %v621 = vadd.f32 %v478, %v617
    %v622 = vadd.f32 %v479, %v618
    %v623 = vmax.f32 %v619, 0.0
    %v624 = vmax.f32 %v620, 0.0
    %v625 = vmax.f32 %v621, 0.0
    %v626 = vmax.f32 %v622, 0.0
    %v627 = vmin.f32 %v623, 1.0
    %v628 = vmin.f32 %v624, 1.0
    %v629 = vmin.f32 %v625, 1.0
    %v630 = vmin.f32 %v626, 1.0
    %v631 = vadd.f32 %v488, %v615
    %v632 = vadd.f32 %v489, %v616
    %v633 = vadd.f32 %v490, %v617
    %v634 = vadd.f32 %v491, %v618
    %v635 = vmax.f32 %v631, -1.0
    %v636 = vmax.f32 %v632, -1.0
    %v637 = vmax.f32 %v633, -1.0
    %v638 = vmax.f32 %v634, -1.0
    %v639 = vmin.f32 %v635, 0.0
    %v640 = vmin.f32 %v636, 0.0
    %v641 = vmin.f32 %v637, 0.0
    %v642 = vmin.f32 %v638, 0.0
    %v644 = vsel %vm49, %v595, 0
    %v647 = vsel %vm49, %v639, 0
    %v650 = vsel %vm49, %v640, 0
    %v653 = vsel %vm49, %v641, 0
    %v656 = vsel %vm49, %v642, 0
    %658 = vmatpush.xpose.msra.mxu0 0.0
    %659 = vmatpush.xpose.msra.mxu0 0.0
    %660 = vmatpush.xpose.msra.mxu0 0.0
    %661 = vmatpush.xpose.msra.mxu0 0.0
    %662 = vmatpush.xpose.msra.mxu0 0.0
    %663 = vmatpush.xpose.msra.mxu0 0.0
    %664 = vmatpush.xpose.msra.mxu0 0.0
    %665 = vmatpush.xpose.msra.mxu0 0.0
    %666 = vmatpush.xpose.msra.mxu0 0.0
    %667 = vmatpush.xpose.msra.mxu0 0.0
    %668 = vmatpush.xpose.msra.mxu0 0.0
    %669 = vmatpush.xpose.msra.mxu0 0.0
    %670 = vmatpush.xpose.msra.mxu0 %v656
    %671 = vmatpush.xpose.msra.mxu0 %v653
    %672 = vmatpush.xpose.msra.mxu0 %v650
    %673 = vmatpush.xpose.msra.mxu0 %v647
    %674 = vmatmul.f32.gmra.mxu0 %v644
    %v675 = vpop.f32.mrf.mxu0
    %v676 = vadd.f32 0.0, %v675
    %677 = vdwg.mxu0
    %v678 = vmul.f32 %v676, 0.125
    %v679 = vadd.f32 %v558, %v678
    %v680 = vmul.f32 %v532, 0.9
    %v681 = vmul.f32 %v679, 0.1
    %v682 = vadd.f32 %v680, %v681
    %v683 = vmax.f32 %v682, 0.0
    %684 = vst.msk [vmem:[#allocation2 + $0x3] sm:$0x1] %vm230, %v683
    %v685 = vld [vmem:[#allocation2 + $0x4] sm:$0x1]
    %v687 = vsel %vm73, %v683, 0
    %689 = vmatpush.msra.mxu0 0.0
    %690 = vmatpush.msra.mxu0 0.0
    %691 = vmatpush.msra.mxu0 0.0
    %692 = vmatpush.msra.mxu0 0.0
    %693 = vmatpush.msra.mxu0 0.0
    %694 = vmatpush.msra.mxu0 0.0
    %695 = vmatpush.msra.mxu0 0.0
    %696 = vmatpush.msra.mxu0 0.0
    %697 = vmatpush.msra.mxu0 0.0
    %698 = vmatpush.msra.mxu0 0.0
    %699 = vmatpush.msra.mxu0 0.0
    %700 = vmatpush.msra.mxu0 0.0
    %701 = vmatpush.msra.mxu0 %v38
    %702 = vmatpush.msra.mxu0 %v37
    %703 = vmatpush.msra.mxu0 %v36
    %704 = vmatpush.msra.mxu0 %v35
    %705 = vmatmul.f32.gmra.mxu0 %v687
    %v706 = vpop.f32.mrf.mxu0
    %v707 = vadd.f32 0.0, %v706
    %708 = vdwg.mxu0
    %v709 = vadd.f32 %v685, %v707
    %v710 = vsub.f32 0.0, %v582
    %711 = vmatpush.msra.mxu0 0.0
    %712 = vmatpush.msra.mxu0 0.0
    %713 = vmatpush.msra.mxu0 0.0
    %714 = vmatpush.msra.mxu0 0.0
    %715 = vmatpush.msra.mxu0 0.0
    %716 = vmatpush.msra.mxu0 0.0
    %717 = vmatpush.msra.mxu0 0.0
    %718 = vmatpush.msra.mxu0 0.0
    %719 = vmatpush.msra.mxu0 0.0
    %720 = vmatpush.msra.mxu0 0.0
    %721 = vmatpush.msra.mxu0 0.0
    %722 = vmatpush.msra.mxu0 0.0
    %723 = vmatpush.msra.mxu0 %v630
    %724 = vmatpush.msra.mxu0 %v629
    %725 = vmatpush.msra.mxu0 %v628
    %726 = vmatpush.msra.mxu0 %v627
    %727 = vmatmul.f32.gmra.mxu0 %v687
    %v728 = vpop.f32.mrf.mxu0
    %v729 = vadd.f32 0.0, %v728
    %730 = vdwg.mxu0
    %v731 = vadd.f32 %v710, %v729
    %v732 = vmul.f32 %v731, 0.0125
    %v733 = vadd.f32 %v582, %v732
    %v734 = vsel %vm130, %v733, -inf
    %735 = vmax.xlane.f32.xlu0 %v734
    %v736 = vpop.xlane.xlu0 %735
    %v737 = vrot.slane %v736, 4
    %v738 = vmax.f32 %v736, %v737
    %v739 = vrot.slane %v738, 2
    %v740 = vmax.f32 %v738, %v739
    %v741 = vrot.slane %v740, 1
    %v742 = vmax.f32 %v740, %v741
    %s743 = vtos %v742
    %v744 = vstv %s743
    %vm745 = vcmp.ge.f32.partialorder %v733, %v744
    %v746 = vsel %vm745, 1.0, 0.0
    %v747 = vsub.f32 0.0, %v599
    %v748 = vadd.f32 %v747, %v746
    %v749 = vmul.f32 %v748, 0.001
    %v750 = vadd.f32 %v599, %v749
    %v751 = vsel %vm130, %v750, -inf
    %752 = vmax.xlane.f32.xlu0 %v751
    %v753 = vpop.xlane.xlu0 %752
    %v754 = vrot.slane %v753, 4
    %v755 = vmax.f32 %v753, %v754
    %v756 = vrot.slane %v755, 2
    %v757 = vmax.f32 %v755, %v756
    %v758 = vrot.slane %v757, 1
    %v759 = vmax.f32 %v757, %v758
    %s760 = vtos %v759
    %v761 = vstv %s760
    %vm762 = vcmp.ge.f32.partialorder %v750, %v761
    %v763 = vsel %vm762, 1.0, 0.0
    %v764 = vsub.f32 %v763, 0.5
    %v765 = vperm.slane %v764, 0
    %v766 = vmul.f32 %v39, %v765
    %v767 = vmul.f32 %v40, %v765
    %v768 = vmul.f32 %v41, %v765
    %v769 = vmul.f32 %v42, %v765
    %v770 = vadd.f32 %v627, %v766
    %v771 = vadd.f32 %v628, %v767
    %v772 = vadd.f32 %v629, %v768
    %v773 = vadd.f32 %v630, %v769
    %v774 = vmax.f32 %v770, 0.0
    %v775 = vmax.f32 %v771, 0.0
    %v776 = vmax.f32 %v772, 0.0
    %v777 = vmax.f32 %v773, 0.0
    %v778 = vmin.f32 %v774, 1.0
    %v779 = vmin.f32 %v775, 1.0
    %v780 = vmin.f32 %v776, 1.0
    %v781 = vmin.f32 %v777, 1.0
    %v782 = vadd.f32 %v639, %v766
    %v783 = vadd.f32 %v640, %v767
    %v784 = vadd.f32 %v641, %v768
    %v785 = vadd.f32 %v642, %v769
    %v786 = vmax.f32 %v782, -1.0
    %v787 = vmax.f32 %v783, -1.0
    %v788 = vmax.f32 %v784, -1.0
    %v789 = vmax.f32 %v785, -1.0
    %v790 = vmin.f32 %v786, 0.0
    %v791 = vmin.f32 %v787, 0.0
    %v792 = vmin.f32 %v788, 0.0
    %v793 = vmin.f32 %v789, 0.0
    %v795 = vsel %vm49, %v746, 0
    %v798 = vsel %vm49, %v790, 0
    %v801 = vsel %vm49, %v791, 0
    %v804 = vsel %vm49, %v792, 0
    %v807 = vsel %vm49, %v793, 0
    %809 = vmatpush.xpose.msra.mxu0 0.0
    %810 = vmatpush.xpose.msra.mxu0 0.0
    %811 = vmatpush.xpose.msra.mxu0 0.0
    %812 = vmatpush.xpose.msra.mxu0 0.0
    %813 = vmatpush.xpose.msra.mxu0 0.0
    %814 = vmatpush.xpose.msra.mxu0 0.0
    %815 = vmatpush.xpose.msra.mxu0 0.0
    %816 = vmatpush.xpose.msra.mxu0 0.0
    %817 = vmatpush.xpose.msra.mxu0 0.0
    %818 = vmatpush.xpose.msra.mxu0 0.0
    %819 = vmatpush.xpose.msra.mxu0 0.0
    %820 = vmatpush.xpose.msra.mxu0 0.0
    %821 = vmatpush.xpose.msra.mxu0 %v807
    %822 = vmatpush.xpose.msra.mxu0 %v804
    %823 = vmatpush.xpose.msra.mxu0 %v801
    %824 = vmatpush.xpose.msra.mxu0 %v798
    %825 = vmatmul.f32.gmra.mxu0 %v795
    %v826 = vpop.f32.mrf.mxu0
    %v827 = vadd.f32 0.0, %v826
    %828 = vdwg.mxu0
    %v829 = vmul.f32 %v827, 0.125
    %v830 = vadd.f32 %v709, %v829
    %v831 = vmul.f32 %v683, 0.9
    %v832 = vmul.f32 %v830, 0.1
    %v833 = vadd.f32 %v831, %v832
    %v834 = vmax.f32 %v833, 0.0
    %835 = vst.msk [vmem:[#allocation2 + $0x4] sm:$0x1] %vm230, %v834
    %v836 = vld [vmem:[#allocation2 + $0x5] sm:$0x1]
    %v838 = vsel %vm73, %v834, 0
    %840 = vmatpush.msra.mxu0 0.0
    %841 = vmatpush.msra.mxu0 0.0
    %842 = vmatpush.msra.mxu0 0.0
    %843 = vmatpush.msra.mxu0 0.0
    %844 = vmatpush.msra.mxu0 0.0
    %845 = vmatpush.msra.mxu0 0.0
    %846 = vmatpush.msra.mxu0 0.0
    %847 = vmatpush.msra.mxu0 0.0
    %848 = vmatpush.msra.mxu0 0.0
    %849 = vmatpush.msra.mxu0 0.0
    %850 = vmatpush.msra.mxu0 0.0
    %851 = vmatpush.msra.mxu0 0.0
    %852 = vmatpush.msra.mxu0 %v38
    %853 = vmatpush.msra.mxu0 %v37
    %854 = vmatpush.msra.mxu0 %v36
    %855 = vmatpush.msra.mxu0 %v35
    %856 = vmatmul.f32.gmra.mxu0 %v838
    %v857 = vpop.f32.mrf.mxu0
    %v858 = vadd.f32 0.0, %v857
    %859 = vdwg.mxu0
    %v860 = vadd.f32 %v836, %v858
    %v861 = vsub.f32 0.0, %v733
    %862 = vmatpush.msra.mxu0 0.0
    %863 = vmatpush.msra.mxu0 0.0
    %864 = vmatpush.msra.mxu0 0.0
    %865 = vmatpush.msra.mxu0 0.0
    %866 = vmatpush.msra.mxu0 0.0
    %867 = vmatpush.msra.mxu0 0.0
    %868 = vmatpush.msra.mxu0 0.0
    %869 = vmatpush.msra.mxu0 0.0
    %870 = vmatpush.msra.mxu0 0.0
    %871 = vmatpush.msra.mxu0 0.0
    %872 = vmatpush.msra.mxu0 0.0
    %873 = vmatpush.msra.mxu0 0.0
    %874 = vmatpush.msra.mxu0 %v781
    %875 = vmatpush.msra.mxu0 %v780
    %876 = vmatpush.msra.mxu0 %v779
    %877 = vmatpush.msra.mxu0 %v778
    %878 = vmatmul.f32.gmra.mxu0 %v838
    %v879 = vpop.f32.mrf.mxu0
    %v880 = vadd.f32 0.0, %v879
    %881 = vdwg.mxu0
    %v882 = vadd.f32 %v861, %v880
    %v883 = vmul.f32 %v882, 0.0125
    %v884 = vadd.f32 %v733, %v883
    %v885 = vsel %vm130, %v884, -inf
    %886 = vmax.xlane.f32.xlu0 %v885
    %v887 = vpop.xlane.xlu0 %886
    %v888 = vrot.slane %v887, 4
    %v889 = vmax.f32 %v887, %v888
    %v890 = vrot.slane %v889, 2
    %v891 = vmax.f32 %v889, %v890
    %v892 = vrot.slane %v891, 1
    %v893 = vmax.f32 %v891, %v892
    %s894 = vtos %v893
    %v895 = vstv %s894
    %vm896 = vcmp.ge.f32.partialorder %v884, %v895
    %v897 = vsel %vm896, 1.0, 0.0
    %v898 = vsub.f32 0.0, %v750
    %v899 = vadd.f32 %v898, %v897
    %v900 = vmul.f32 %v899, 0.001
    %v901 = vadd.f32 %v750, %v900
    %v902 = vsel %vm130, %v901, -inf
    %903 = vmax.xlane.f32.xlu0 %v902
    %v904 = vpop.xlane.xlu0 %903
    %v905 = vrot.slane %v904, 4
    %v906 = vmax.f32 %v904, %v905
    %v907 = vrot.slane %v906, 2
    %v908 = vmax.f32 %v906, %v907
    %v909 = vrot.slane %v908, 1
    %v910 = vmax.f32 %v908, %v909
    %s911 = vtos %v910
    %v912 = vstv %s911
    %vm913 = vcmp.ge.f32.partialorder %v901, %v912
    %v914 = vsel %vm913, 1.0, 0.0
    %v915 = vsub.f32 %v914, 0.5
    %v916 = vperm.slane %v915, 0
    %v917 = vmul.f32 %v39, %v916
    %v918 = vmul.f32 %v40, %v916
    %v919 = vmul.f32 %v41, %v916
    %v920 = vmul.f32 %v42, %v916
    %v921 = vadd.f32 %v778, %v917
    %v922 = vadd.f32 %v779, %v918
    %v923 = vadd.f32 %v780, %v919
    %v924 = vadd.f32 %v781, %v920
    %v925 = vmax.f32 %v921, 0.0
    %v926 = vmax.f32 %v922, 0.0
    %v927 = vmax.f32 %v923, 0.0
    %v928 = vmax.f32 %v924, 0.0
    %v929 = vmin.f32 %v925, 1.0
    %v930 = vmin.f32 %v926, 1.0
    %v931 = vmin.f32 %v927, 1.0
    %v932 = vmin.f32 %v928, 1.0
    %v933 = vadd.f32 %v790, %v917
    %v934 = vadd.f32 %v791, %v918
    %v935 = vadd.f32 %v792, %v919
    %v936 = vadd.f32 %v793, %v920
    %v937 = vmax.f32 %v933, -1.0
    %v938 = vmax.f32 %v934, -1.0
    %v939 = vmax.f32 %v935, -1.0
    %v940 = vmax.f32 %v936, -1.0
    %v941 = vmin.f32 %v937, 0.0
    %v942 = vmin.f32 %v938, 0.0
    %v943 = vmin.f32 %v939, 0.0
    %v944 = vmin.f32 %v940, 0.0
    %v946 = vsel %vm49, %v897, 0
    %v949 = vsel %vm49, %v941, 0
    %v952 = vsel %vm49, %v942, 0
    %v955 = vsel %vm49, %v943, 0
    %v958 = vsel %vm49, %v944, 0
    %960 = vmatpush.xpose.msra.mxu0 0.0
    %961 = vmatpush.xpose.msra.mxu0 0.0
    %962 = vmatpush.xpose.msra.mxu0 0.0
    %963 = vmatpush.xpose.msra.mxu0 0.0
    %964 = vmatpush.xpose.msra.mxu0 0.0
    %965 = vmatpush.xpose.msra.mxu0 0.0
    %966 = vmatpush.xpose.msra.mxu0 0.0
    %967 = vmatpush.xpose.msra.mxu0 0.0
    %968 = vmatpush.xpose.msra.mxu0 0.0
    %969 = vmatpush.xpose.msra.mxu0 0.0
    %970 = vmatpush.xpose.msra.mxu0 0.0
    %971 = vmatpush.xpose.msra.mxu0 0.0
    %972 = vmatpush.xpose.msra.mxu0 %v958
    %973 = vmatpush.xpose.msra.mxu0 %v955
    %974 = vmatpush.xpose.msra.mxu0 %v952
    %975 = vmatpush.xpose.msra.mxu0 %v949
    %976 = vmatmul.f32.gmra.mxu0 %v946
    %v977 = vpop.f32.mrf.mxu0
    %v978 = vadd.f32 0.0, %v977
    %979 = vdwg.mxu0
    %v980 = vmul.f32 %v978, 0.125
    %v981 = vadd.f32 %v860, %v980
    %v982 = vmul.f32 %v834, 0.9
    %v983 = vmul.f32 %v981, 0.1
    %v984 = vadd.f32 %v982, %v983
    %v985 = vmax.f32 %v984, 0.0
    %986 = vst.msk [vmem:[#allocation2 + $0x5] sm:$0x1] %vm230, %v985
    %v987 = vld [vmem:[#allocation2 + $0x6] sm:$0x1]
    %v989 = vsel %vm73, %v985, 0
    %991 = vmatpush.msra.mxu0 0.0
    %992 = vmatpush.msra.mxu0 0.0
    %993 = vmatpush.msra.mxu0 0.0
    %994 = vmatpush.msra.mxu0 0.0
    %995 = vmatpush.msra.mxu0 0.0
    %996 = vmatpush.msra.mxu0 0.0
    %997 = vmatpush.msra.mxu0 0.0
    %998 = vmatpush.msra.mxu0 0.0
    %999 = vmatpush.msra.mxu0 0.0
    %1000 = vmatpush.msra.mxu0 0.0
    %1001 = vmatpush.msra.mxu0 0.0
    %1002 = vmatpush.msra.mxu0 0.0
    %1003 = vmatpush.msra.mxu0 %v38
    %1004 = vmatpush.msra.mxu0 %v37
    %1005 = vmatpush.msra.mxu0 %v36
    %1006 = vmatpush.msra.mxu0 %v35
    %1007 = vmatmul.f32.gmra.mxu0 %v989
    %v1008 = vpop.f32.mrf.mxu0
    %v1009 = vadd.f32 0.0, %v1008
    %1010 = vdwg.mxu0
    %v1011 = vadd.f32 %v987, %v1009
    %v1012 = vsub.f32 0.0, %v884
    %1013 = vmatpush.msra.mxu0 0.0
    %1014 = vmatpush.msra.mxu0 0.0
    %1015 = vmatpush.msra.mxu0 0.0
    %1016 = vmatpush.msra.mxu0 0.0
    %1017 = vmatpush.msra.mxu0 0.0
    %1018 = vmatpush.msra.mxu0 0.0
    %1019 = vmatpush.msra.mxu0 0.0
    %1020 = vmatpush.msra.mxu0 0.0
    %1021 = vmatpush.msra.mxu0 0.0
    %1022 = vmatpush.msra.mxu0 0.0
    %1023 = vmatpush.msra.mxu0 0.0
    %1024 = vmatpush.msra.mxu0 0.0
    %1025 = vmatpush.msra.mxu0 %v932
    %1026 = vmatpush.msra.mxu0 %v931
    %1027 = vmatpush.msra.mxu0 %v930
    %1028 = vmatpush.msra.mxu0 %v929
    %1029 = vmatmul.f32.gmra.mxu0 %v989
    %v1030 = vpop.f32.mrf.mxu0
    %v1031 = vadd.f32 0.0, %v1030
    %1032 = vdwg.mxu0
    %v1033 = vadd.f32 %v1012, %v1031
    %v1034 = vmul.f32 %v1033, 0.0125
    %v1035 = vadd.f32 %v884, %v1034
    %v1036 = vsel %vm130, %v1035, -inf
    %1037 = vmax.xlane.f32.xlu0 %v1036
    %v1038 = vpop.xlane.xlu0 %1037
    %v1039 = vrot.slane %v1038, 4
    %v1040 = vmax.f32 %v1038, %v1039
    %v1041 = vrot.slane %v1040, 2
    %v1042 = vmax.f32 %v1040, %v1041
    %v1043 = vrot.slane %v1042, 1
    %v1044 = vmax.f32 %v1042, %v1043
    %s1045 = vtos %v1044
    %v1046 = vstv %s1045
    %vm1047 = vcmp.ge.f32.partialorder %v1035, %v1046
    %v1048 = vsel %vm1047, 1.0, 0.0
    %v1049 = vsub.f32 0.0, %v901
    %v1050 = vadd.f32 %v1049, %v1048
    %v1051 = vmul.f32 %v1050, 0.001
    %v1052 = vadd.f32 %v901, %v1051
    %v1053 = vsel %vm130, %v1052, -inf
    %1054 = vmax.xlane.f32.xlu0 %v1053
    %v1055 = vpop.xlane.xlu0 %1054
    %v1056 = vrot.slane %v1055, 4
    %v1057 = vmax.f32 %v1055, %v1056
    %v1058 = vrot.slane %v1057, 2
    %v1059 = vmax.f32 %v1057, %v1058
    %v1060 = vrot.slane %v1059, 1
    %v1061 = vmax.f32 %v1059, %v1060
    %s1062 = vtos %v1061
    %v1063 = vstv %s1062
    %vm1064 = vcmp.ge.f32.partialorder %v1052, %v1063
    %v1065 = vsel %vm1064, 1.0, 0.0
    %v1066 = vsub.f32 %v1065, 0.5
    %v1067 = vperm.slane %v1066, 0
    %v1068 = vmul.f32 %v39, %v1067
    %v1069 = vmul.f32 %v40, %v1067
    %v1070 = vmul.f32 %v41, %v1067
    %v1071 = vmul.f32 %v42, %v1067
    %v1072 = vadd.f32 %v929, %v1068
    %v1073 = vadd.f32 %v930, %v1069
    %v1074 = vadd.f32 %v931, %v1070
    %v1075 = vadd.f32 %v932, %v1071
    %v1076 = vmax.f32 %v1072, 0.0
    %v1077 = vmax.f32 %v1073, 0.0
    %v1078 = vmax.f32 %v1074, 0.0
    %v1079 = vmax.f32 %v1075, 0.0
    %v1080 = vmin.f32 %v1076, 1.0
    %v1081 = vmin.f32 %v1077, 1.0
    %v1082 = vmin.f32 %v1078, 1.0
    %v1083 = vmin.f32 %v1079, 1.0
    %v1084 = vadd.f32 %v941, %v1068
    %v1085 = vadd.f32 %v942, %v1069
    %v1086 = vadd.f32 %v943, %v1070
    %v1087 = vadd.f32 %v944, %v1071
    %v1088 = vmax.f32 %v1084, -1.0
    %v1089 = vmax.f32 %v1085, -1.0
    %v1090 = vmax.f32 %v1086, -1.0
    %v1091 = vmax.f32 %v1087, -1.0
    %v1092 = vmin.f32 %v1088, 0.0
    %v1093 = vmin.f32 %v1089, 0.0
    %v1094 = vmin.f32 %v1090, 0.0
    %v1095 = vmin.f32 %v1091, 0.0
    %v1097 = vsel %vm49, %v1048, 0
    %v1100 = vsel %vm49, %v1092, 0
    %v1103 = vsel %vm49, %v1093, 0
    %v1106 = vsel %vm49, %v1094, 0
    %v1109 = vsel %vm49, %v1095, 0
    %1111 = vmatpush.xpose.msra.mxu0 0.0
    %1112 = vmatpush.xpose.msra.mxu0 0.0
    %1113 = vmatpush.xpose.msra.mxu0 0.0
    %1114 = vmatpush.xpose.msra.mxu0 0.0
    %1115 = vmatpush.xpose.msra.mxu0 0.0
    %1116 = vmatpush.xpose.msra.mxu0 0.0
    %1117 = vmatpush.xpose.msra.mxu0 0.0
    %1118 = vmatpush.xpose.msra.mxu0 0.0
    %1119 = vmatpush.xpose.msra.mxu0 0.0
    %1120 = vmatpush.xpose.msra.mxu0 0.0
    %1121 = vmatpush.xpose.msra.mxu0 0.0
    %1122 = vmatpush.xpose.msra.mxu0 0.0
    %1123 = vmatpush.xpose.msra.mxu0 %v1109
    %1124 = vmatpush.xpose.msra.mxu0 %v1106
    %1125 = vmatpush.xpose.msra.mxu0 %v1103
    %1126 = vmatpush.xpose.msra.mxu0 %v1100
    %1127 = vmatmul.f32.gmra.mxu0 %v1097
    %v1128 = vpop.f32.mrf.mxu0
    %v1129 = vadd.f32 0.0, %v1128
    %1130 = vdwg.mxu0
    %v1131 = vmul.f32 %v1129, 0.125
    %v1132 = vadd.f32 %v1011, %v1131
    %v1133 = vmul.f32 %v985, 0.9
    %v1134 = vmul.f32 %v1132, 0.1
    %v1135 = vadd.f32 %v1133, %v1134
    %v1136 = vmax.f32 %v1135, 0.0
    %1137 = vst.msk [vmem:[#allocation2 + $0x6] sm:$0x1] %vm230, %v1136
    %v1138 = vld [vmem:[#allocation2 + $0x7] sm:$0x1]
    %v1140 = vsel %vm73, %v1136, 0
    %1142 = vmatpush.msra.mxu0 0.0
    %1143 = vmatpush.msra.mxu0 0.0
    %1144 = vmatpush.msra.mxu0 0.0
    %1145 = vmatpush.msra.mxu0 0.0
    %1146 = vmatpush.msra.mxu0 0.0
    %1147 = vmatpush.msra.mxu0 0.0
    %1148 = vmatpush.msra.mxu0 0.0
    %1149 = vmatpush.msra.mxu0 0.0
    %1150 = vmatpush.msra.mxu0 0.0
    %1151 = vmatpush.msra.mxu0 0.0
    %1152 = vmatpush.msra.mxu0 0.0
    %1153 = vmatpush.msra.mxu0 0.0
    %1154 = vmatpush.msra.mxu0 %v38
    %1155 = vmatpush.msra.mxu0 %v37
    %1156 = vmatpush.msra.mxu0 %v36
    %1157 = vmatpush.msra.mxu0 %v35
    %1158 = vmatmul.f32.gmra.mxu0 %v1140
    %v1159 = vpop.f32.mrf.mxu0
    %v1160 = vadd.f32 0.0, %v1159
    %1161 = vdwg.mxu0
    %v1162 = vadd.f32 %v1138, %v1160
    %v1163 = vsub.f32 0.0, %v1035
    %1164 = vmatpush.msra.mxu0 0.0
    %1165 = vmatpush.msra.mxu0 0.0
    %1166 = vmatpush.msra.mxu0 0.0
    %1167 = vmatpush.msra.mxu0 0.0
    %1168 = vmatpush.msra.mxu0 0.0
    %1169 = vmatpush.msra.mxu0 0.0
    %1170 = vmatpush.msra.mxu0 0.0
    %1171 = vmatpush.msra.mxu0 0.0
    %1172 = vmatpush.msra.mxu0 0.0
    %1173 = vmatpush.msra.mxu0 0.0
    %1174 = vmatpush.msra.mxu0 0.0
    %1175 = vmatpush.msra.mxu0 0.0
    %1176 = vmatpush.msra.mxu0 %v1083
    %1177 = vmatpush.msra.mxu0 %v1082
    %1178 = vmatpush.msra.mxu0 %v1081
    %1179 = vmatpush.msra.mxu0 %v1080
    %1180 = vmatmul.f32.gmra.mxu0 %v1140
    %v1181 = vpop.f32.mrf.mxu0
    %v1182 = vadd.f32 0.0, %v1181
    %1183 = vdwg.mxu0
    %v1184 = vadd.f32 %v1163, %v1182
    %v1185 = vmul.f32 %v1184, 0.0125
    %v1186 = vadd.f32 %v1035, %v1185
    %v1187 = vsel %vm130, %v1186, -inf
    %1188 = vmax.xlane.f32.xlu0 %v1187
    %v1189 = vpop.xlane.xlu0 %1188
    %v1190 = vrot.slane %v1189, 4
    %v1191 = vmax.f32 %v1189, %v1190
    %v1192 = vrot.slane %v1191, 2
    %v1193 = vmax.f32 %v1191, %v1192
    %v1194 = vrot.slane %v1193, 1
    %v1195 = vmax.f32 %v1193, %v1194
    %s1196 = vtos %v1195
    %v1197 = vstv %s1196
    %vm1198 = vcmp.ge.f32.partialorder %v1186, %v1197
    %v1199 = vsel %vm1198, 1.0, 0.0
    %v1200 = vsub.f32 0.0, %v1052
    %v1201 = vadd.f32 %v1200, %v1199
    %v1202 = vmul.f32 %v1201, 0.001
    %v1203 = vadd.f32 %v1052, %v1202
    %v1204 = vsel %vm130, %v1203, -inf
    %1205 = vmax.xlane.f32.xlu0 %v1204
    %v1206 = vpop.xlane.xlu0 %1205
    %v1207 = vrot.slane %v1206, 4
    %v1208 = vmax.f32 %v1206, %v1207
    %v1209 = vrot.slane %v1208, 2
    %v1210 = vmax.f32 %v1208, %v1209
    %v1211 = vrot.slane %v1210, 1
    %v1212 = vmax.f32 %v1210, %v1211
    %s1213 = vtos %v1212
    %v1214 = vstv %s1213
    %vm1215 = vcmp.ge.f32.partialorder %v1203, %v1214
    %v1216 = vsel %vm1215, 1.0, 0.0
    %v1217 = vsub.f32 %v1216, 0.5
    %v1218 = vperm.slane %v1217, 0
    %v1219 = vmul.f32 %v39, %v1218
    %v1220 = vmul.f32 %v40, %v1218
    %v1221 = vmul.f32 %v41, %v1218
    %v1222 = vmul.f32 %v42, %v1218
    %v1223 = vadd.f32 %v1092, %v1219
    %v1224 = vadd.f32 %v1093, %v1220
    %v1225 = vadd.f32 %v1094, %v1221
    %v1226 = vadd.f32 %v1095, %v1222
    %v1227 = vmax.f32 %v1223, -1.0
    %v1228 = vmax.f32 %v1224, -1.0
    %v1229 = vmax.f32 %v1225, -1.0
    %v1230 = vmax.f32 %v1226, -1.0
    %v1231 = vmin.f32 %v1227, 0.0
    %v1232 = vmin.f32 %v1228, 0.0
    %v1233 = vmin.f32 %v1229, 0.0
    %v1234 = vmin.f32 %v1230, 0.0
    %v1236 = vsel %vm49, %v1199, 0
    %v1239 = vsel %vm49, %v1231, 0
    %v1242 = vsel %vm49, %v1232, 0
    %v1245 = vsel %vm49, %v1233, 0
    %v1248 = vsel %vm49, %v1234, 0
    %1250 = vmatpush.xpose.msra.mxu0 0.0
    %1251 = vmatpush.xpose.msra.mxu0 0.0
    %1252 = vmatpush.xpose.msra.mxu0 0.0
    %1253 = vmatpush.xpose.msra.mxu0 0.0
    %1254 = vmatpush.xpose.msra.mxu0 0.0
    %1255 = vmatpush.xpose.msra.mxu0 0.0
    %1256 = vmatpush.xpose.msra.mxu0 0.0
    %1257 = vmatpush.xpose.msra.mxu0 0.0
    %1258 = vmatpush.xpose.msra.mxu0 0.0
    %1259 = vmatpush.xpose.msra.mxu0 0.0
    %1260 = vmatpush.xpose.msra.mxu0 0.0
    %1261 = vmatpush.xpose.msra.mxu0 0.0
    %1262 = vmatpush.xpose.msra.mxu0 %v1248
    %1263 = vmatpush.xpose.msra.mxu0 %v1245
    %1264 = vmatpush.xpose.msra.mxu0 %v1242
    %1265 = vmatpush.xpose.msra.mxu0 %v1239
    %1266 = vmatmul.f32.gmra.mxu0 %v1236
    %v1267 = vpop.f32.mrf.mxu0
    %v1268 = vadd.f32 0.0, %v1267
    %1269 = vdwg.mxu0
    %v1270 = vmul.f32 %v1268, 0.125
    %v1271 = vadd.f32 %v1162, %v1270
    %v1272 = vmul.f32 %v1136, 0.9
    %v1273 = vmul.f32 %v1271, 0.1
    %v1274 = vadd.f32 %v1272, %v1273
    %v1275 = vmax.f32 %v1274, 0.0
    %1276 = vst.msk [vmem:[#allocation2 + $0x7] sm:$0x1] %vm230, %v1275
    %v1277 = vld [vmem:[#allocation2] sm:$0xff]
    %v1278 = vld [vmem:[%s4] sm:$0xff]
    %v1279 = vld [vmem:[%s4 + $0x8] sm:$0xff]
    %v1280 = vld [vmem:[%s4 + $0x10] sm:$0xff]
    %v1281 = vld [vmem:[%s4 + $0x18] sm:$0xff]
    %v1282 = vld [vmem:[%s5] sm:$0x1]
    %v1284 = vperm.slane %v1282, 0
    %v1287 = vsel %vm73, %v1277, 0
    %1289 = vmatpush.msra.mxu0 0.0
    %1290 = vmatpush.msra.mxu0 0.0
    %1291 = vmatpush.msra.mxu0 0.0
    %1292 = vmatpush.msra.mxu0 0.0
    %1293 = vmatpush.msra.mxu0 0.0
    %1294 = vmatpush.msra.mxu0 0.0
    %1295 = vmatpush.msra.mxu0 0.0
    %1296 = vmatpush.msra.mxu0 0.0
    %1297 = vmatpush.msra.mxu0 0.0
    %1298 = vmatpush.msra.mxu0 0.0
    %1299 = vmatpush.msra.mxu0 0.0
    %1300 = vmatpush.msra.mxu0 0.0
    %1301 = vmatpush.msra.mxu0 %v1281
    %1302 = vmatpush.msra.mxu0 %v1280
    %1303 = vmatpush.msra.mxu0 %v1279
    %1304 = vmatpush.msra.mxu0 %v1278
    %1305 = vmatmul.f32.gmra.mxu0 %v1287
    %v1306 = vpop.f32.mrf.mxu0
    %v1307 = vadd.f32 %v1284, %v1306
    %1308 = vdwg.mxu0
    %vm1309 = vcmask 31744
    %1310 = vst.msk [vmem:[%s9] sm:$0xff] %vm1309, %v1307
    // Predicated region
    $region38: #{tpu_custom_call.1} parent=1 // pred_check
      _
    $region39: #{tpu_custom_call.1} parent=1 // pred_check_branch
      %1312 = sbr.rel (0) target = $region41
    $region40: #{tpu_custom_call.1} parent=1 // pred_region
      _
    $region41: #{tpu_custom_call.1} parent=1 // pred_fallthru
      _
    // Predicated region
    $region42: #{tpu_custom_call.1} parent=1 // pred_check
      _
    $region43: #{tpu_custom_call.1} parent=1 // pred_check_branch
      %1314 = sbr.rel (0) target = $region45
    $region44: #{tpu_custom_call.1} parent=1 // pred_region
      %1316 = vsyncadd [#allocation3], 0
      %s1318 = sshll.u32 [#allocation2], 4
      %s1319 = int_to_ptr.vmem [resolvable:$true] %s1318
      %s1320 = sshll.u32 %s10, 4
      %s1321 = int_to_ptr.hbm [resolvable:$true] %s1320
      %1323 = dma.vmem_to_hbm [thread:$0]  %s1319, 128, %s1321, [#allocation3]
    $region45: #{tpu_custom_call.1} parent=1 // pred_fallthru
      _
    // Predicated region
    $region46: #{tpu_custom_call.1} parent=1 // pred_check
      _
    $region47: #{tpu_custom_call.1} parent=1 // pred_check_branch
      %1325 = sbr.rel (0) target = $region49
    $region48: #{tpu_custom_call.1} parent=1 // pred_region
      _
    $region49: #{tpu_custom_call.1} parent=1 // pred_fallthru
      _
    // Predicated region
    $region50: #{tpu_custom_call.1} parent=1 // pred_check
      _
    $region51: #{tpu_custom_call.1} parent=1 // pred_check_branch
      %1327 = sbr.rel (0) target = $region53
    $region52: #{tpu_custom_call.1} parent=1 // pred_region
      %1329 = dma.done [#allocation3], 128
    $region53: #{tpu_custom_call.1} parent=1 // pred_fallthru
      _
    %1330 = vsyncpa [#allocation3], 1

</llo_original>
